<compile_context>
chip_gen: v5e
topology: v5e:2x2
jax: 0.10.0
libtpu: 0.0.40
codegen_flags: <defaults>
</compile_context>

<pallas_src>
import functools

import jax
import jax.numpy as jnp
import numpy as np
from jax.experimental import pallas as pl
from jax.experimental.pallas import tpu as pltpu

NUM_CLASSES = 5
NUM_ANCHORS = 6
HEAD_COUT = NUM_ANCHORS * (NUM_CLASSES + 4)   # fused cls(30) ++ reg(24) = 54
HEAD_PAD = 128                                # lane-dense padded head output width
FEAT_PAD = 64                                 # every backbone stage padded to 64 ch
CIN_SLAB = 8                                  # slab channels: [r, g, b, 0, onehot(4)]
NUM_LEVELS = 4                                # feature levels: s3, c5, extra0, extra1


# ----------------------------- fused Pallas kernel ---------------------------

def _ssd_fused_kernel(x_ref, w_stem_ref, w_back_ref, b_back_ref,
                      w_head_ref, w_hbias_ref, o_ref):
    """One grid step == one row tile (rows = pixels of all levels of all images).

    x_ref      (T, 8)        slab rows: [r,g,b, 0, onehot(level) x4], compute dtype
    w_stem_ref (8, 64)       stem weight (3x16 embedded, zero elsewhere)
    w_back_ref (4, 64, 64)   s3/c5/extra0/extra1 weights, zero-padded
    b_back_ref (8, 64) f32   biases: rows 0..4 = stem,s3,c5,e0,e1 (zero-padded)
    w_head_ref (4, 64, 128)  per-level fused cls+reg head weights, zero-padded
    w_hbias_ref(8, 128)      rows 4..7 = per-level fused head bias (54 wide)
    o_ref      (T, 128) f32  fused header output, cols 0..53 valid
    """
    f32 = jnp.float32
    cdt = w_stem_ref.dtype
    x = x_ref[...]                                              # (T, 8)

    def pw(v, w, b):   # pointwise conv: MXU matmul, f32 accumulate + bias + ReLU
        y = jnp.dot(v, w, preferred_element_type=f32) + b
        return jnp.maximum(y, 0.0)

    # Backbone / extras chain on the whole tile.  Rows of shallow levels running
    # through the deeper convs are cheap dead MXU work that keeps every stage a
    # single dense (T,64)x(64,64) matmul.
    h  = pw(x,              w_stem_ref[...], b_back_ref[0:1, :])   # stem   (T,64)
    s3 = pw(h.astype(cdt),  w_back_ref[0],   b_back_ref[1:2, :])   # s3
    c5 = pw(s3.astype(cdt), w_back_ref[1],   b_back_ref[2:3, :])   # c5
    e0 = pw(c5.astype(cdt), w_back_ref[2],   b_back_ref[3:4, :])   # extra0
    e1 = pw(e0.astype(cdt), w_back_ref[3],   b_back_ref[4:5, :])   # extra1
    # base_net's fc stage is dead in the reference forward() -> not computed.

    # Fused cls+reg headers of all four levels, accumulated into one lane-dense
    # (T,128) f32 output.  The per-row level one-hot (input cols 4..7) selects
    # the right head bias through w_hbias (rows 0..3 are zero, so the RGB
    # channels contribute nothing) and zeroes the other levels' features.
    acc = jnp.dot(x, w_hbias_ref[...], preferred_element_type=f32)  # per-row bias
    for lvl, feat in enumerate((s3, c5, e0, e1)):
        m = x[:, 4 + lvl:5 + lvl].astype(f32)                       # (T,1) in {0,1}
        acc += jnp.dot((feat * m).astype(cdt), w_head_ref[lvl],
                       preferred_element_type=f32)
    o_ref[...] = acc                                                # unmasked stores


# ----------------------------- geometry / params -----------------------------

def _round_up(n, m):
    return ((n + m - 1) // m) * m


def _pick_tile_rows(total_rows, target):
    """Row-tile size: big enough to amortise per-step overhead, but >=2 tiles on
    small inputs so a v7x megacore can put one tile on each TensorCore.  At the
    default target (512 rows) the per-step live set is ~2 MiB, far below the
    32 MiB default scoped VMEM even on v7x (64 MiB physical)."""
    target = max(8, _round_up(target, 8))
    if total_rows >= 2 * target:
        return target
    return max(8, _round_up(-(-total_rows // 2), 8))


def _row_geometry(batch, h_in, w_in, padded_total):
    """Trace-time constants: flat pixel gather indices + per-row level one-hot.

    Rows are ordered [image][level0 row-major, level1, level2, level3]; level L
    samples the input at stride 2**(L+1) (1x1 stride-2 convs, padding=0).
    Padding rows get index 0 and a zero one-hot (kernel output for them is 0).
    """
    idx_chunks, oh_chunks = [], []
    for b in range(batch):
        for lvl in range(NUM_LEVELS):
            s = 2 ** (lvl + 1)
            ii, jj = np.meshgrid(np.arange(0, h_in, s), np.arange(0, w_in, s),
                                 indexing="ij")
            idx_chunks.append(b * h_in * w_in + (ii * w_in + jj).reshape(-1))
            oh = np.zeros((ii.size, NUM_LEVELS), np.float32)
            oh[:, lvl] = 1.0
            oh_chunks.append(oh)
    gidx = np.concatenate(idx_chunks)
    onehot = np.concatenate(oh_chunks, axis=0)
    pad = padded_total - gidx.shape[0]
    gidx = np.pad(gidx, (0, pad)).astype(np.int32)
    onehot = np.pad(onehot, ((0, pad), (0, 0)))
    return gidx, onehot


def _make_conv_params(key, cin, cout):
    kw, kb = jax.random.split(key)
    bound = (6.0 / (cin + cout)) ** 0.5          # xavier-uniform-ish
    w = jax.random.uniform(kw, (cin, cout), jnp.float32, -bound, bound)
    b = jax.random.uniform(kb, (cout,), jnp.float32, -0.1, 0.1)
    return w, b


def init_ssd_params(key):
    keys = jax.random.split(key, 16)
    p = {}
    # base_net: stem (stride 1) + 3 stride-2 stages (s3, c5, fc)
    p["stem"] = _make_conv_params(keys[0], 3, 16)       # 16x16
    p["s3"] = _make_conv_params(keys[1], 16, 32)        # 8x8
    p["c5"] = _make_conv_params(keys[2], 32, 64)        # 4x4
    p["fc"] = _make_conv_params(keys[3], 64, 64)        # dead in forward()
    # extras (applied starting from c5_x, per the reference forward())
    p["extra0"] = _make_conv_params(keys[4], 64, 64)    # 2x2
    p["extra1"] = _make_conv_params(keys[5], 64, 64)    # 1x1
    header_cins = [32, 64, 64, 64]
    p["cls"] = [_make_conv_params(keys[6 + i], cin, NUM_ANCHORS * NUM_CLASSES)
                for i, cin in enumerate(header_cins)]
    p["reg"] = [_make_conv_params(keys[10 + i], cin, NUM_ANCHORS * 4)
                for i, cin in enumerate(header_cins)]
    return p


def _pack_weights(p, compute_dtype):
    """Pad/stack the per-layer params into 5 kernel operands (review item 8)."""
    w_stem = jnp.pad(p["stem"][0], ((0, CIN_SLAB - 3), (0, FEAT_PAD - 16)))
    back_names = ("s3", "c5", "extra0", "extra1")
    w_back = jnp.stack([
        jnp.pad(p[n][0], ((0, FEAT_PAD - p[n][0].shape[0]),
                          (0, FEAT_PAD - p[n][0].shape[1])))
        for n in back_names])                                        # (4,64,64)
    b_back = jnp.zeros((8, FEAT_PAD), jnp.float32)
    for i, n in enumerate(("stem",) + back_names):
        b_back = b_back.at[i, :p[n][1].shape[0]].set(p[n][1])        # f32 epilogue
    w_head, w_hbias = [], jnp.zeros((CIN_SLAB, HEAD_PAD), jnp.float32)
    for lvl in range(NUM_LEVELS):
        wc, bc = p["cls"][lvl]
        wr, br = p["reg"][lvl]
        wf = jnp.concatenate([wc, wr], axis=1)                       # (cin,54)
        w_head.append(jnp.pad(wf, ((0, FEAT_PAD - wf.shape[0]),
                                   (0, HEAD_PAD - HEAD_COUT))))
        w_hbias = w_hbias.at[4 + lvl, :HEAD_COUT].set(jnp.concatenate([bc, br]))
    w_head = jnp.stack(w_head)                                       # (4,64,128)
    return (w_stem.astype(compute_dtype), w_back.astype(compute_dtype), b_back,
            w_head.astype(compute_dtype), w_hbias.astype(compute_dtype))


# --------------------------------- forward -----------------------------------

def ssd_forward(x_nchw, p, *, compute_dtype=jnp.bfloat16, row_tile=512):
    """SSD forward (is_test=False branch), fully fused into one pallas_call.

    x_nchw: (B, 3, H, W) float32 NCHW (PyTorch convention), H/W multiples of 16.
    compute_dtype: bf16 (default; MXU-native on v5e/v6e/v7x, f32 accumulate and
                   f32 bias/ReLU epilogue) or f32 for near-exact results.
    returns (confidences (B, P, NUM_CLASSES), locations (B, P, 4)).
    """
    B, cin_img, H, W = x_nchw.shape
    assert cin_img == 3 and H % 16 == 0 and W % 16 == 0

    sizes = [(H >> (l + 1)) * (W >> (l + 1)) for l in range(NUM_LEVELS)]
    rows_per_image = sum(sizes)                         # 85 for 16x16
    total_rows = B * rows_per_image                     # batch folded into rows
    tile = _pick_tile_rows(total_rows, row_tile)
    grid = -(-total_rows // tile)
    padded_total = grid * tile

    # --- trace-time constants: pixel gather indices + per-row level one-hot.
    gidx_np, onehot_np = _row_geometry(B, H, W, padded_total)

    # --- host glue (boundary work, kept to one transpose + one gather + one concat)
    x_pix = jnp.transpose(x_nchw, (0, 2, 3, 1)).reshape(B * H * W, cin_img)
    rows_rgb = jnp.take(x_pix, jnp.asarray(gidx_np), axis=0)        # (R,3)
    slab = jnp.concatenate(
        [rows_rgb, jnp.zeros((padded_total, 1), rows_rgb.dtype),
         jnp.asarray(onehot_np)], axis=1).astype(compute_dtype)     # (R,8)

    w_stem, w_back, b_back, w_head, w_hbias = _pack_weights(p, compute_dtype)

    out = pl.pallas_call(
        _ssd_fused_kernel,
        out_shape=jax.ShapeDtypeStruct((padded_total, HEAD_PAD), jnp.float32),
        grid_spec=pltpu.PrefetchScalarGridSpec(
            num_scalar_prefetch=0,
            grid=(grid,),
            in_specs=[
                pl.BlockSpec((tile, CIN_SLAB), lambda r: (r, 0)),
                # constant block index -> weights DMA'd once, VMEM-resident
                pl.BlockSpec((CIN_SLAB, FEAT_PAD), lambda r: (0, 0)),
                pl.BlockSpec((NUM_LEVELS, FEAT_PAD, FEAT_PAD), lambda r: (0, 0, 0)),
                pl.BlockSpec((8, FEAT_PAD), lambda r: (0, 0)),
                pl.BlockSpec((NUM_LEVELS, FEAT_PAD, HEAD_PAD), lambda r: (0, 0, 0)),
                pl.BlockSpec((CIN_SLAB, HEAD_PAD), lambda r: (0, 0)),
            ],
            out_specs=pl.BlockSpec((tile, HEAD_PAD), lambda r: (r, 0)),
        ),
        compiler_params=pltpu.CompilerParams(
            dimension_semantics=("parallel",)),   # row tiles shard across TCs (v7x)
    )(slab, w_stem, w_back, b_back, w_head, w_hbias)

    # --- epilogue: rows are level-ordered and contiguous per image, so the
    # reference's per-level permute/view/concat collapses to one reshape+slice.
    valid = out[:total_rows].reshape(B, rows_per_image, HEAD_PAD)
    ncls = NUM_ANCHORS * NUM_CLASSES
    confidences = valid[..., :ncls].reshape(B, rows_per_image * NUM_ANCHORS,
                                            NUM_CLASSES)
    locations = valid[..., ncls:HEAD_COUT].reshape(B, rows_per_image * NUM_ANCHORS, 4)
    # TODO(synk): is_test=True branch (softmax + prior-box decode) not implemented.
    return confidences, locations


# ------------------------------ pure-JAX reference ----------------------------

def ssd_reference(x_nchw, p):
    """Pure-JAX f32 reference of the SSD forward (is_test=False branch)."""
    B = x_nchw.shape[0]
    hi = jax.lax.Precision.HIGHEST
    x = jnp.transpose(x_nchw, (0, 2, 3, 1))

    def conv1x1(v, wb, relu=True):
        w, b = wb
        y = jnp.einsum("bhwc,cd->bhwd", v, w, precision=hi) + b
        return jnp.maximum(y, 0.0) if relu else y

    def down(v):   # 1x1 stride-2 conv (padding=0) == subsample + pointwise conv
        return v[:, ::2, ::2, :]

    h = conv1x1(x, p["stem"])
    s3 = conv1x1(down(h), p["s3"])
    c5 = conv1x1(down(s3), p["c5"])
    e0 = conv1x1(down(c5), p["extra0"])
    e1 = conv1x1(down(e0), p["extra1"])
    confs, locs = [], []
    for lvl, f in enumerate((s3, c5, e0, e1)):
        c = conv1x1(f, p["cls"][lvl], relu=False)
        r = conv1x1(f, p["reg"][lvl], relu=False)
        confs.append(c.reshape(B, -1, NUM_CLASSES))
        locs.append(r.reshape(B, -1, 4))
    return jnp.concatenate(confs, 1), jnp.concatenate(locs, 1)


# ----------------------------------- main -------------------------------------

if __name__ == "__main__":
    key = jax.random.PRNGKey(0)
    k_params, k_x = jax.random.split(key)

    params = init_ssd_params(k_params)
    x = jax.random.normal(k_x, (2, 3, 16, 16), jnp.float32)   # NCHW input

    # exact-mode (f32 compute) run, checked against the pure-JAX reference
    fwd_f32 = jax.jit(functools.partial(ssd_forward, compute_dtype=jnp.float32))
    conf, loc = fwd_f32(x, params)
    jax.block_until_ready((conf, loc))
    conf_ref, loc_ref = jax.jit(ssd_reference)(x, params)
    jax.block_until_ready((conf_ref, loc_ref))

    # expected num priors: 8*8*6 + 4*4*6 + 2*2*6 + 1*1*6 = 510
    assert conf.shape == (2, 510, NUM_CLASSES), conf.shape
    assert loc.shape == (2, 510, 4), loc.shape
    assert float(jnp.max(jnp.abs(conf - conf_ref))) < 5e-2
    assert float(jnp.max(jnp.abs(loc - loc_ref))) < 5e-2

    # default bf16-compute run (f32 accumulate / epilogue), shape check only
    fwd = jax.jit(ssd_forward)
    conf_bf, loc_bf = fwd(x, params)
    jax.block_until_ready((conf_bf, loc_bf))
    assert conf_bf.shape == (2, 510, NUM_CLASSES), conf_bf.shape
    assert loc_bf.shape == (2, 510, 4), loc_bf.shape

    print("KERNEL_OK")
</pallas_src>

<mosaic_0001>
module attributes {stable_mosaic.version = 11 : i64} {
  func.func @_ssd_fused_kernel(%arg0: i32, %arg1: memref<88x8xf32, #tpu.memory_space<vmem>>, %arg2: memref<8x64xf32, #tpu.memory_space<vmem>>, %arg3: memref<4x64x64xf32, #tpu.memory_space<vmem>>, %arg4: memref<8x64xf32, #tpu.memory_space<vmem>>, %arg5: memref<4x64x128xf32, #tpu.memory_space<vmem>>, %arg6: memref<8x128xf32, #tpu.memory_space<vmem>>, %arg7: memref<88x128xf32, #tpu.memory_space<vmem>>) attributes {dimension_semantics = [#tpu.dimension_semantics<parallel>], iteration_bounds = array<i64: 2>, scalar_prefetch = 0 : i64, scratch_operands = 0 : i64, tpu.core_type = #tpu.core_type<tc>, window_params = [{transform_indices = @transform_0, window_bounds = array<i64: 88, 8>}, {pipeline_mode = #tpu.pipeline_mode<synchronous>, transform_indices = @transform_1, window_bounds = array<i64: 8, 64>}, {pipeline_mode = #tpu.pipeline_mode<synchronous>, transform_indices = @transform_2, window_bounds = array<i64: 4, 64, 64>}, {pipeline_mode = #tpu.pipeline_mode<synchronous>, transform_indices = @transform_3, window_bounds = array<i64: 8, 64>}, {pipeline_mode = #tpu.pipeline_mode<synchronous>, transform_indices = @transform_4, window_bounds = array<i64: 4, 64, 128>}, {pipeline_mode = #tpu.pipeline_mode<synchronous>, transform_indices = @transform_5, window_bounds = array<i64: 8, 128>}, {transform_indices = @transform_6, window_bounds = array<i64: 88, 128>}]} {
    %c0 = arith.constant 0 : index
    %c0_0 = arith.constant 0 : index
    %0 = vector.load %arg1[%c0, %c0_0] : memref<88x8xf32, #tpu.memory_space<vmem>>, vector<88x8xf32>
    %c0_1 = arith.constant 0 : index
    %c0_2 = arith.constant 0 : index
    %1 = vector.load %arg2[%c0_1, %c0_2] : memref<8x64xf32, #tpu.memory_space<vmem>>, vector<8x64xf32>
    %c0_3 = arith.constant 0 : index
    %c0_4 = arith.constant 0 : index
    %2 = vector.load %arg4[%c0_3, %c0_4] : memref<8x64xf32, #tpu.memory_space<vmem>>, vector<1x64xf32>
    %cst = arith.constant dense<0.000000e+00> : vector<88x64xf32>
    %3 = tpu.matmul %0, %1, %cst {dimension_numbers = #tpu.dot_dimension_numbers<[1], [0], [0], [1], [0, 0, 1, 1], [], []>} : vector<88x8xf32>, vector<8x64xf32>, vector<88x64xf32> -> vector<88x64xf32>
    %4 = vector.broadcast %2 : vector<1x64xf32> to vector<88x64xf32>
    %5 = arith.addf %3, %4 : vector<88x64xf32>
    %cst_5 = arith.constant 0.000000e+00 : f32
    %6 = vector.broadcast %cst_5 : f32 to vector<88x64xf32>
    %7 = arith.maximumf %5, %6 : vector<88x64xf32>
    %c0_6 = arith.constant 0 : index
    %c0_7 = arith.constant 0 : index
    %c0_8 = arith.constant 0 : index
    %8 = vector.load %arg3[%c0_6, %c0_7, %c0_8] : memref<4x64x64xf32, #tpu.memory_space<vmem>>, vector<1x64x64xf32>
    %9 = vector.shape_cast %8 : vector<1x64x64xf32> to vector<64x64xf32>
    %c1 = arith.constant 1 : index
    %c0_9 = arith.constant 0 : index
    %10 = vector.load %arg4[%c1, %c0_9] : memref<8x64xf32, #tpu.memory_space<vmem>>, vector<1x64xf32>
    %cst_10 = arith.constant dense<0.000000e+00> : vector<88x64xf32>
    %11 = tpu.matmul %7, %9, %cst_10 {dimension_numbers = #tpu.dot_dimension_numbers<[1], [0], [0], [1], [0, 0, 1, 1], [], []>} : vector<88x64xf32>, vector<64x64xf32>, vector<88x64xf32> -> vector<88x64xf32>
    %12 = vector.broadcast %10 : vector<1x64xf32> to vector<88x64xf32>
    %13 = arith.addf %11, %12 : vector<88x64xf32>
    %cst_11 = arith.constant 0.000000e+00 : f32
    %14 = vector.broadcast %cst_11 : f32 to vector<88x64xf32>
    %15 = arith.maximumf %13, %14 : vector<88x64xf32>
    %c1_12 = arith.constant 1 : index
    %c0_13 = arith.constant 0 : index
    %c0_14 = arith.constant 0 : index
    %16 = vector.load %arg3[%c1_12, %c0_13, %c0_14] : memref<4x64x64xf32, #tpu.memory_space<vmem>>, vector<1x64x64xf32>
    %17 = vector.shape_cast %16 : vector<1x64x64xf32> to vector<64x64xf32>
    %c2 = arith.constant 2 : index
    %c0_15 = arith.constant 0 : index
    %18 = vector.load %arg4[%c2, %c0_15] : memref<8x64xf32, #tpu.memory_space<vmem>>, vector<1x64xf32>
    %cst_16 = arith.constant dense<0.000000e+00> : vector<88x64xf32>
    %19 = tpu.matmul %15, %17, %cst_16 {dimension_numbers = #tpu.dot_dimension_numbers<[1], [0], [0], [1], [0, 0, 1, 1], [], []>} : vector<88x64xf32>, vector<64x64xf32>, vector<88x64xf32> -> vector<88x64xf32>
    %20 = vector.broadcast %18 : vector<1x64xf32> to vector<88x64xf32>
    %21 = arith.addf %19, %20 : vector<88x64xf32>
    %cst_17 = arith.constant 0.000000e+00 : f32
    %22 = vector.broadcast %cst_17 : f32 to vector<88x64xf32>
    %23 = arith.maximumf %21, %22 : vector<88x64xf32>
    %c2_18 = arith.constant 2 : index
    %c0_19 = arith.constant 0 : index
    %c0_20 = arith.constant 0 : index
    %24 = vector.load %arg3[%c2_18, %c0_19, %c0_20] : memref<4x64x64xf32, #tpu.memory_space<vmem>>, vector<1x64x64xf32>
    %25 = vector.shape_cast %24 : vector<1x64x64xf32> to vector<64x64xf32>
    %c3 = arith.constant 3 : index
    %c0_21 = arith.constant 0 : index
    %26 = vector.load %arg4[%c3, %c0_21] : memref<8x64xf32, #tpu.memory_space<vmem>>, vector<1x64xf32>
    %cst_22 = arith.constant dense<0.000000e+00> : vector<88x64xf32>
    %27 = tpu.matmul %23, %25, %cst_22 {dimension_numbers = #tpu.dot_dimension_numbers<[1], [0], [0], [1], [0, 0, 1, 1], [], []>} : vector<88x64xf32>, vector<64x64xf32>, vector<88x64xf32> -> vector<88x64xf32>
    %28 = vector.broadcast %26 : vector<1x64xf32> to vector<88x64xf32>
    %29 = arith.addf %27, %28 : vector<88x64xf32>
    %cst_23 = arith.constant 0.000000e+00 : f32
    %30 = vector.broadcast %cst_23 : f32 to vector<88x64xf32>
    %31 = arith.maximumf %29, %30 : vector<88x64xf32>
    %c3_24 = arith.constant 3 : index
    %c0_25 = arith.constant 0 : index
    %c0_26 = arith.constant 0 : index
    %32 = vector.load %arg3[%c3_24, %c0_25, %c0_26] : memref<4x64x64xf32, #tpu.memory_space<vmem>>, vector<1x64x64xf32>
    %33 = vector.shape_cast %32 : vector<1x64x64xf32> to vector<64x64xf32>
    %c4 = arith.constant 4 : index
    %c0_27 = arith.constant 0 : index
    %34 = vector.load %arg4[%c4, %c0_27] : memref<8x64xf32, #tpu.memory_space<vmem>>, vector<1x64xf32>
    %cst_28 = arith.constant dense<0.000000e+00> : vector<88x64xf32>
    %35 = tpu.matmul %31, %33, %cst_28 {dimension_numbers = #tpu.dot_dimension_numbers<[1], [0], [0], [1], [0, 0, 1, 1], [], []>} : vector<88x64xf32>, vector<64x64xf32>, vector<88x64xf32> -> vector<88x64xf32>
    %36 = vector.broadcast %34 : vector<1x64xf32> to vector<88x64xf32>
    %37 = arith.addf %35, %36 : vector<88x64xf32>
    %cst_29 = arith.constant 0.000000e+00 : f32
    %38 = vector.broadcast %cst_29 : f32 to vector<88x64xf32>
    %39 = arith.maximumf %37, %38 : vector<88x64xf32>
    %c0_30 = arith.constant 0 : index
    %c0_31 = arith.constant 0 : index
    %40 = vector.load %arg6[%c0_30, %c0_31] : memref<8x128xf32, #tpu.memory_space<vmem>>, vector<8x128xf32>
    %cst_32 = arith.constant dense<0.000000e+00> : vector<88x128xf32>
    %41 = tpu.matmul %0, %40, %cst_32 {dimension_numbers = #tpu.dot_dimension_numbers<[1], [0], [0], [1], [0, 0, 1, 1], [], []>} : vector<88x8xf32>, vector<8x128xf32>, vector<88x128xf32> -> vector<88x128xf32>
    %42 = vector.extract_strided_slice %0 {offsets = [0, 4], sizes = [88, 1], strides = [1, 1]} : vector<88x8xf32> to vector<88x1xf32>
    %43 = vector.broadcast %42 : vector<88x1xf32> to vector<88x64xf32>
    %44 = arith.mulf %15, %43 : vector<88x64xf32>
    %c0_33 = arith.constant 0 : index
    %c0_34 = arith.constant 0 : index
    %c0_35 = arith.constant 0 : index
    %45 = vector.load %arg5[%c0_33, %c0_34, %c0_35] : memref<4x64x128xf32, #tpu.memory_space<vmem>>, vector<1x64x128xf32>
    %46 = vector.shape_cast %45 : vector<1x64x128xf32> to vector<64x128xf32>
    %cst_36 = arith.constant dense<0.000000e+00> : vector<88x128xf32>
    %47 = tpu.matmul %44, %46, %cst_36 {dimension_numbers = #tpu.dot_dimension_numbers<[1], [0], [0], [1], [0, 0, 1, 1], [], []>} : vector<88x64xf32>, vector<64x128xf32>, vector<88x128xf32> -> vector<88x128xf32>
    %48 = arith.addf %41, %47 : vector<88x128xf32>
    %49 = vector.extract_strided_slice %0 {offsets = [0, 5], sizes = [88, 1], strides = [1, 1]} : vector<88x8xf32> to vector<88x1xf32>
    %50 = vector.broadcast %49 : vector<88x1xf32> to vector<88x64xf32>
    %51 = arith.mulf %23, %50 : vector<88x64xf32>
    %c1_37 = arith.constant 1 : index
    %c0_38 = arith.constant 0 : index
    %c0_39 = arith.constant 0 : index
    %52 = vector.load %arg5[%c1_37, %c0_38, %c0_39] : memref<4x64x128xf32, #tpu.memory_space<vmem>>, vector<1x64x128xf32>
    %53 = vector.shape_cast %52 : vector<1x64x128xf32> to vector<64x128xf32>
    %cst_40 = arith.constant dense<0.000000e+00> : vector<88x128xf32>
    %54 = tpu.matmul %51, %53, %cst_40 {dimension_numbers = #tpu.dot_dimension_numbers<[1], [0], [0], [1], [0, 0, 1, 1], [], []>} : vector<88x64xf32>, vector<64x128xf32>, vector<88x128xf32> -> vector<88x128xf32>
    %55 = arith.addf %48, %54 : vector<88x128xf32>
    %56 = vector.extract_strided_slice %0 {offsets = [0, 6], sizes = [88, 1], strides = [1, 1]} : vector<88x8xf32> to vector<88x1xf32>
    %57 = vector.broadcast %56 : vector<88x1xf32> to vector<88x64xf32>
    %58 = arith.mulf %31, %57 : vector<88x64xf32>
    %c2_41 = arith.constant 2 : index
    %c0_42 = arith.constant 0 : index
    %c0_43 = arith.constant 0 : index
    %59 = vector.load %arg5[%c2_41, %c0_42, %c0_43] : memref<4x64x128xf32, #tpu.memory_space<vmem>>, vector<1x64x128xf32>
    %60 = vector.shape_cast %59 : vector<1x64x128xf32> to vector<64x128xf32>
    %cst_44 = arith.constant dense<0.000000e+00> : vector<88x128xf32>
    %61 = tpu.matmul %58, %60, %cst_44 {dimension_numbers = #tpu.dot_dimension_numbers<[1], [0], [0], [1], [0, 0, 1, 1], [], []>} : vector<88x64xf32>, vector<64x128xf32>, vector<88x128xf32> -> vector<88x128xf32>
    %62 = arith.addf %55, %61 : vector<88x128xf32>
    %63 = vector.extract_strided_slice %0 {offsets = [0, 7], sizes = [88, 1], strides = [1, 1]} : vector<88x8xf32> to vector<88x1xf32>
    %64 = vector.broadcast %63 : vector<88x1xf32> to vector<88x64xf32>
    %65 = arith.mulf %39, %64 : vector<88x64xf32>
    %c3_45 = arith.constant 3 : index
    %c0_46 = arith.constant 0 : index
    %c0_47 = arith.constant 0 : index
    %66 = vector.load %arg5[%c3_45, %c0_46, %c0_47] : memref<4x64x128xf32, #tpu.memory_space<vmem>>, vector<1x64x128xf32>
    %67 = vector.shape_cast %66 : vector<1x64x128xf32> to vector<64x128xf32>
    %cst_48 = arith.constant dense<0.000000e+00> : vector<88x128xf32>
    %68 = tpu.matmul %65, %67, %cst_48 {dimension_numbers = #tpu.dot_dimension_numbers<[1], [0], [0], [1], [0, 0, 1, 1], [], []>} : vector<88x64xf32>, vector<64x128xf32>, vector<88x128xf32> -> vector<88x128xf32>
    %69 = arith.addf %62, %68 : vector<88x128xf32>
    %c0_49 = arith.constant 0 : index
    %c0_50 = arith.constant 0 : index
    %70 = vector.load %arg7[%c0_49, %c0_50] : memref<88x128xf32, #tpu.memory_space<vmem>>, vector<88x128xf32>
    tpu.vector_store %arg7[%c0_49, %c0_50], %69 {strides = array<i32>} : memref<88x128xf32, #tpu.memory_space<vmem>>, vector<88x128xf32>,
    return
  }
  func.func @transform_0(%arg0: i32) -> (i32, i32) {
    %c0_i32 = arith.constant 0 : i32
    %c0_i32_0 = arith.constant 0 : i32
    return %arg0, %c0_i32 : i32, i32
  }
  func.func @transform_1(%arg0: i32) -> (i32, i32) {
    %c0_i32 = arith.constant 0 : i32
    %c0_i32_0 = arith.constant 0 : i32
    %c0_i32_1 = arith.constant 0 : i32
    return %c0_i32, %c0_i32_0 : i32, i32
  }
  func.func @transform_2(%arg0: i32) -> (i32, i32, i32) {
    %c0_i32 = arith.constant 0 : i32
    %c0_i32_0 = arith.constant 0 : i32
    %c0_i32_1 = arith.constant 0 : i32
    %c0_i32_2 = arith.constant 0 : i32
    return %c0_i32, %c0_i32_0, %c0_i32_1 : i32, i32, i32
  }
  func.func @transform_3(%arg0: i32) -> (i32, i32) {
    %c0_i32 = arith.constant 0 : i32
    %c0_i32_0 = arith.constant 0 : i32
    %c0_i32_1 = arith.constant 0 : i32
    return %c0_i32, %c0_i32_0 : i32, i32
  }
  func.func @transform_4(%arg0: i32) -> (i32, i32, i32) {
    %c0_i32 = arith.constant 0 : i32
    %c0_i32_0 = arith.constant 0 : i32
    %c0_i32_1 = arith.constant 0 : i32
    %c0_i32_2 = arith.constant 0 : i32
    return %c0_i32, %c0_i32_0, %c0_i32_1 : i32, i32, i32
  }
  func.func @transform_5(%arg0: i32) -> (i32, i32) {
    %c0_i32 = arith.constant 0 : i32
    %c0_i32_0 = arith.constant 0 : i32
    %c0_i32_1 = arith.constant 0 : i32
    return %c0_i32, %c0_i32_0 : i32, i32
  }
  func.func @transform_6(%arg0: i32) -> (i32, i32) {
    %c0_i32 = arith.constant 0 : i32
    %c0_i32_0 = arith.constant 0 : i32
    return %arg0, %c0_i32 : i32, i32
  }
}

</mosaic_0001>

<llo_original>
// kernel: ssd_forward.1
$region0: #{ssd_forward.1}
  #allocation0 [shape = 'u32[]', space=smem, size = 0x4, offset = 0x4, fixed_abs, tag = 'smem constant byte address 0x4 - core index']
  #allocation1 [shape = 'u32[72,128]{1,0:T(1,128)}', space=vmem, size = 0x9000, scoped, tag = 'internal scratch']
  %s0 = inlined_call_operand.vmem [shape: f32[176,8], index: 0, kind: input, shape index: {}]
  %s1 = inlined_call_operand.vmem [shape: f32[8,64], index: 1, kind: input, shape index: {}]
  %s2 = inlined_call_operand.vmem [shape: f32[4,64,64], index: 2, kind: input, shape index: {}]
  %s3 = inlined_call_operand.vmem [shape: f32[8,64], index: 3, kind: input, shape index: {}]
  %s4 = inlined_call_operand.vmem [shape: f32[4,64,128], index: 4, kind: input, shape index: {}]
  %s5 = inlined_call_operand.vmem [shape: f32[8,128], index: 5, kind: input, shape index: {}]
  %s6 = inlined_call_operand.vmem [shape: f32[176,128], index: 6, kind: output, shape index: {}]
  %s7 = sld [smem:[#allocation0]]
  $region57: #{ssd_forward.1} parent=0
    _
  %s9 = ssub.s32 1, %s7
  %s10 = scalar_select 0, %s9, %s7
  loop: start=0, step=1, limit=4
  $region2: #{ssd_forward.1} parent=0 // loop_pre_header
    _
  $region3: #{ssd_forward.1} parent=0 // loop_header
    %s12 = sphi 0, %s16
    %p13 = scmp.ge.s32.totalorder %s12, 4
    %s22 = sphi 0, %s24
    %s25 = sphi 0, %s22
    %s26 = sphi 0, %s25
    %s42 = sphi 0, %s26
    %s46 = sphi 0, %s46
    %s48 = sphi 0, %s46
    %s49 = sphi 0, %s48
    %s63 = sphi 0, %s49
    %s67 = sphi 0, %s67
    %s69 = sphi 0, %s67
    %s70 = sphi 0, %s69
    %s84 = sphi 0, %s70
    %s88 = sphi 0, %s88
    %s90 = sphi 0, %s88
    %s91 = sphi 0, %s90
    %s105 = sphi 0, %s91
    %s109 = sphi 0, %s109
    %s111 = sphi 0, %s109
    %s112 = sphi 0, %s111
    %s126 = sphi 0, %s112
    %s130 = sphi 0, %s130
    %s132 = sphi 0, %s130
    %s133 = sphi 0, %s132
    %s147 = sphi 0, %s133
    %s153 = sphi 0, %s155
    %s156 = sphi 0, %s153
    %s157 = sphi 0, %s156
    %s173 = sphi 0, %s157
  $region4: #{ssd_forward.1} parent=0 // loop_header_branch
    %15 = sbr.rel (%p13) target = $region8
  $region5: #{ssd_forward.1} parent=0 // loop_body
    %s17 = ssub.s32 %s12, 1
    %s18 = ssub.s32 %s12, 2
    %s19 = sadd.s32 %s12, 1
    %s20 = ssub.s32 %s12, %s19
    %p21 = scmp.eq.s32.totalorder %s20, 0
    %s23 = sadd.s32 %s22, 1
    %s24 = scalar_select %p21, %s22, %s23
    %p27 = pneg %p21
    %p28 = scmp.eq.s32.totalorder %s12, 1
    %p29 = por %p27, %p28
    %p30 = scmp.ne.s32.totalorder %s22, %s25
    %p31 = scmp.eq.s32.totalorder %s12, 0
    %p32 = por %p30, %p31
    %p33 = scmp.ne.s32.totalorder %s22, %s25
    %p34 = scmp.eq.s32.totalorder %s17, 1
    %p35 = por %p33, %p34
    %p36 = scmp.ne.s32.totalorder %s25, %s26
    %p37 = scmp.eq.s32.totalorder %s17, 0
    %p38 = por %p36, %p37
    %p39 = scmp.ne.s32.totalorder %s25, %s26
    %p40 = scmp.eq.s32.totalorder %s18, 1
    %p41 = por %p39, %p40
    %p43 = scmp.ne.s32.totalorder %s26, %s42
    %p44 = scmp.eq.s32.totalorder %s18, 0
    %p45 = por %p43, %p44
    %s47 = sadd.s32 %s46, 1
    %p50 = scmp.eq.s32.totalorder %s12, 1
    %p51 = scmp.ne.s32.totalorder %s46, %s48
    %p52 = scmp.eq.s32.totalorder %s12, 0
    %p53 = por %p51, %p52
    %p54 = scmp.ne.s32.totalorder %s46, %s48
    %p55 = scmp.eq.s32.totalorder %s17, 1
    %p56 = por %p54, %p55
    %p57 = scmp.ne.s32.totalorder %s48, %s49
    %p58 = scmp.eq.s32.totalorder %s17, 0
    %p59 = por %p57, %p58
    %p60 = scmp.ne.s32.totalorder %s48, %s49
    %p61 = scmp.eq.s32.totalorder %s18, 1
    %p62 = por %p60, %p61
    %p64 = scmp.ne.s32.totalorder %s49, %s63
    %p65 = scmp.eq.s32.totalorder %s18, 0
    %p66 = por %p64, %p65
    %s68 = sadd.s32 %s67, 1
    %p71 = scmp.eq.s32.totalorder %s12, 1
    %p72 = scmp.ne.s32.totalorder %s67, %s69
    %p73 = scmp.eq.s32.totalorder %s12, 0
    %p74 = por %p72, %p73
    %p75 = scmp.ne.s32.totalorder %s67, %s69
    %p76 = scmp.eq.s32.totalorder %s17, 1
    %p77 = por %p75, %p76
    %p78 = scmp.ne.s32.totalorder %s69, %s70
    %p79 = scmp.eq.s32.totalorder %s17, 0
    %p80 = por %p78, %p79
    %p81 = scmp.ne.s32.totalorder %s69, %s70
    %p82 = scmp.eq.s32.totalorder %s18, 1
    %p83 = por %p81, %p82
    %p85 = scmp.ne.s32.totalorder %s70, %s84
    %p86 = scmp.eq.s32.totalorder %s18, 0
    %p87 = por %p85, %p86
    %s89 = sadd.s32 %s88, 1
    %p92 = scmp.eq.s32.totalorder %s12, 1
    %p93 = scmp.ne.s32.totalorder %s88, %s90
    %p94 = scmp.eq.s32.totalorder %s12, 0
    %p95 = por %p93, %p94
    %p96 = scmp.ne.s32.totalorder %s88, %s90
    %p97 = scmp.eq.s32.totalorder %s17, 1
    %p98 = por %p96, %p97
    %p99 = scmp.ne.s32.totalorder %s90, %s91
    %p100 = scmp.eq.s32.totalorder %s17, 0
    %p101 = por %p99, %p100
    %p102 = scmp.ne.s32.totalorder %s90, %s91
    %p103 = scmp.eq.s32.totalorder %s18, 1
    %p104 = por %p102, %p103
    %p106 = scmp.ne.s32.totalorder %s91, %s105
    %p107 = scmp.eq.s32.totalorder %s18, 0
    %p108 = por %p106, %p107
    %s110 = sadd.s32 %s109, 1
    %p113 = scmp.eq.s32.totalorder %s12, 1
    %p114 = scmp.ne.s32.totalorder %s109, %s111
    %p115 = scmp.eq.s32.totalorder %s12, 0
    %p116 = por %p114, %p115
    %p117 = scmp.ne.s32.totalorder %s109, %s111
    %p118 = scmp.eq.s32.totalorder %s17, 1
    %p119 = por %p117, %p118
    %p120 = scmp.ne.s32.totalorder %s111, %s112
    %p121 = scmp.eq.s32.totalorder %s17, 0
    %p122 = por %p120, %p121
    %p123 = scmp.ne.s32.totalorder %s111, %s112
    %p124 = scmp.eq.s32.totalorder %s18, 1
    %p125 = por %p123, %p124
    %p127 = scmp.ne.s32.totalorder %s112, %s126
    %p128 = scmp.eq.s32.totalorder %s18, 0
    %p129 = por %p127, %p128
    %s131 = sadd.s32 %s130, 1
    %p134 = scmp.eq.s32.totalorder %s12, 1
    %p135 = scmp.ne.s32.totalorder %s130, %s132
    %p136 = scmp.eq.s32.totalorder %s12, 0
    %p137 = por %p135, %p136
    %p138 = scmp.ne.s32.totalorder %s130, %s132
    %p139 = scmp.eq.s32.totalorder %s17, 1
    %p140 = por %p138, %p139
    %p141 = scmp.ne.s32.totalorder %s132, %s133
    %p142 = scmp.eq.s32.totalorder %s17, 0
    %p143 = por %p141, %p142
    %p144 = scmp.ne.s32.totalorder %s132, %s133
    %p145 = scmp.eq.s32.totalorder %s18, 1
    %p146 = por %p144, %p145
    %p148 = scmp.ne.s32.totalorder %s133, %s147
    %p149 = scmp.eq.s32.totalorder %s18, 0
    %p150 = por %p148, %p149
    %s151 = ssub.s32 %s12, %s19
    %p152 = scmp.eq.s32.totalorder %s151, 0
    %s154 = sadd.s32 %s153, 1
    %s155 = scalar_select %p152, %s153, %s154
    %p158 = pneg %p152
    %p159 = scmp.eq.s32.totalorder %s12, 1
    %p160 = por %p158, %p159
    %p161 = scmp.ne.s32.totalorder %s153, %s156
    %p162 = scmp.eq.s32.totalorder %s12, 0
    %p163 = por %p161, %p162
    %p164 = scmp.ne.s32.totalorder %s153, %s156
    %p165 = scmp.eq.s32.totalorder %s17, 1
    %p166 = por %p164, %p165
    %p167 = scmp.ne.s32.totalorder %s156, %s157
    %p168 = scmp.eq.s32.totalorder %s17, 0
    %p169 = por %p167, %p168
    %p170 = scmp.ne.s32.totalorder %s156, %s157
    %p171 = scmp.eq.s32.totalorder %s18, 1
    %p172 = por %p170, %p171
    %p174 = scmp.ne.s32.totalorder %s157, %s173
    %p175 = scmp.eq.s32.totalorder %s18, 0
    %p176 = por %p174, %p175
    %p177 = scmp.le.s32.totalorder 1, %s12
    %p178 = scmp.lt.s32.totalorder %s12, 3
    %p179 = pnand %p177, %p178
    %p180 = pneg %p179
    // Predicated region
    $region9: #{ssd_forward.1} parent=5 // pred_check
      _
    $region10: #{ssd_forward.1} parent=5 // pred_check_branch
      %182 = sbr.rel (%p179) target = $region12
    $region11: #{ssd_forward.1} parent=5 // pred_region
      %s183 = ssub.s32 %s12, 1
      // Predicated region
      $region13: #{ssd_forward.1} parent=11 // pred_check
        %p184 = pneg %p59
      $region14: #{ssd_forward.1} parent=11 // pred_check_branch
        %186 = sbr.rel (%p184) target = $region16
      $region15: #{ssd_forward.1} parent=11 // pred_region
        _
      $region16: #{ssd_forward.1} parent=11 // pred_fallthru
        _
      // Predicated region
      $region17: #{ssd_forward.1} parent=11 // pred_check
        %p187 = pneg %p80
      $region18: #{ssd_forward.1} parent=11 // pred_check_branch
        %189 = sbr.rel (%p187) target = $region20
      $region19: #{ssd_forward.1} parent=11 // pred_region
        _
      $region20: #{ssd_forward.1} parent=11 // pred_fallthru
        _
      // Predicated region
      $region21: #{ssd_forward.1} parent=11 // pred_check
        %p190 = pneg %p101
      $region22: #{ssd_forward.1} parent=11 // pred_check_branch
        %192 = sbr.rel (%p190) target = $region24
      $region23: #{ssd_forward.1} parent=11 // pred_region
        _
      $region24: #{ssd_forward.1} parent=11 // pred_fallthru
        _
      // Predicated region
      $region25: #{ssd_forward.1} parent=11 // pred_check
        %p193 = pneg %p122
      $region26: #{ssd_forward.1} parent=11 // pred_check_branch
        %195 = sbr.rel (%p193) target = $region28
      $region27: #{ssd_forward.1} parent=11 // pred_region
        _
      $region28: #{ssd_forward.1} parent=11 // pred_fallthru
        _
      // Predicated region
      $region29: #{ssd_forward.1} parent=11 // pred_check
        %p196 = pneg %p143
      $region30: #{ssd_forward.1} parent=11 // pred_check_branch
        %198 = sbr.rel (%p196) target = $region32
      $region31: #{ssd_forward.1} parent=11 // pred_region
        _
      $region32: #{ssd_forward.1} parent=11 // pred_fallthru
        _
    $region12: #{ssd_forward.1} parent=5 // pred_fallthru
      _
    %p199 = scmp.lt.s32.totalorder %s12, 2
    // Predicated region
    $region33: #{ssd_forward.1} parent=5 // pred_check
      %p200 = pneg %p199
    $region34: #{ssd_forward.1} parent=5 // pred_check_branch
      %202 = sbr.rel (%p200) target = $region36
    $region35: #{ssd_forward.1} parent=5 // pred_region
      // Predicated region
      $region37: #{ssd_forward.1} parent=35 // pred_check
        %p203 = pneg %p32
      $region38: #{ssd_forward.1} parent=35 // pred_check_branch
        %205 = sbr.rel (%p203) target = $region40
      $region39: #{ssd_forward.1} parent=35 // pred_region
        %s206 = smul.u32 11, %s12
        %p207 = scmp.lt.s32.totalorder %s206, 21
        %s208 = scalar_select %p207, %s206, 21
        %s209 = smul.addr %s208, 8
        %s210 = scalar_lea.vmem %s0, %s209
        %s211 = smul.u32 11, %s12
      $region40: #{ssd_forward.1} parent=35 // pred_fallthru
        _
    $region36: #{ssd_forward.1} parent=5 // pred_fallthru
      _
    %p212 = scmp.le.s32.totalorder 1, %s12
    %p213 = scmp.lt.s32.totalorder %s12, 3
    %p214 = pnand %p212, %p213
    %p215 = pneg %p214
    // Predicated region
    $region41: #{ssd_forward.1} parent=5 // pred_check
      _
    $region42: #{ssd_forward.1} parent=5 // pred_check_branch
      %217 = sbr.rel (%p214) target = $region44
    $region43: #{ssd_forward.1} parent=5 // pred_region
      %s218 = ssub.s32 %s12, 1
      %s219 = smul.u32 11, %s17
      %p220 = scmp.lt.s32.totalorder %s219, 21
      %s221 = scalar_select %p220, %s219, 21
      %s222 = smul.addr %s221, 8
      %s223 = scalar_lea.vmem %s0, %s222
      %p224 = pneg %p38
      %p225 = pneg %p35
      %p226 = pneg %p59
      %p227 = pneg %p56
      %p228 = pneg %p80
      %p229 = pneg %p77
      %p230 = pneg %p101
      %p231 = pneg %p98
      %p232 = pneg %p122
      %p233 = pneg %p119
      %p234 = pneg %p143
      %p235 = pneg %p140
      %p236 = pneg %p169
      %p237 = pneg %p166
      %s238 = smul.u32 11, %s17
      %p239 = scmp.lt.s32.totalorder %s238, 21
      %s240 = scalar_select %p239, %s238, 21
      %s241 = smul.addr %s240, 8
      %s242 = scalar_lea.vmem %s6, %s241
      %s243 = smul.u32 11, %s17
      %p244 = scmp.lt.s32.totalorder %s243, 21
      %s245 = scalar_select %p244, %s243, 21
      %s246 = smul.addr %s245, 8
      %s247 = scalar_lea.vmem %s0, %s246
      %s248 = smul.u32 11, %s17
      %s249 = smul.u32 11, %s17
      %p250 = scmp.lt.s32.totalorder %s249, 21
      %s251 = scalar_select %p250, %s249, 21
      %s252 = smul.addr %s251, 8
      %s253 = scalar_lea.vmem %s6, %s252
      %s254 = smul.u32 11, %s17
      %v255 = vld [vmem:[%s247] sm:$0xff]
      %v256 = vld [vmem:[%s247 + $0x8] sm:$0xff]
      %v257 = vld [vmem:[%s247 + $0x10] sm:$0xff]
      %v258 = vld [vmem:[%s247 + $0x18] sm:$0xff]
      %v259 = vld [vmem:[%s247 + $0x20] sm:$0xff]
      %v260 = vld [vmem:[%s247 + $0x28] sm:$0xff]
      %v261 = vld [vmem:[%s247 + $0x30] sm:$0xff]
      %v262 = vld [vmem:[%s247 + $0x38] sm:$0xff]
      %v263 = vld [vmem:[%s247 + $0x40] sm:$0xff]
      %v264 = vld [vmem:[%s247 + $0x48] sm:$0xff]
      %v265 = vld [vmem:[%s247 + $0x50] sm:$0xff]
      %v266 = vld [vmem:[%s1] sm:$0xff]
      %v267 = vld [vmem:[%s3] sm:$0x1]
      %v268 = vperm.slane %v267, 0
      %vm269 = vcmask 64512
      %v271 = vsel %vm269, %v255, 0
      %v274 = vsel %vm269, %v256, 0
      %v277 = vsel %vm269, %v257, 0
      %v280 = vsel %vm269, %v258, 0
      %v283 = vsel %vm269, %v259, 0
      %v286 = vsel %vm269, %v260, 0
      %v289 = vsel %vm269, %v261, 0
      %v292 = vsel %vm269, %v262, 0
      %v295 = vsel %vm269, %v263, 0
      %v298 = vsel %vm269, %v264, 0
      %v301 = vsel %vm269, %v265, 0
      %303 = vmatpush.msra.mxu0 0.0
      %304 = vmatpush.msra.mxu0 0.0
      %305 = vmatpush.msra.mxu0 0.0
      %306 = vmatpush.msra.mxu0 0.0
      %307 = vmatpush.msra.mxu0 0.0
      %308 = vmatpush.msra.mxu0 0.0
      %309 = vmatpush.msra.mxu0 0.0
      %310 = vmatpush.msra.mxu0 0.0
      %311 = vmatpush.msra.mxu0 0.0
      %312 = vmatpush.msra.mxu0 0.0
      %313 = vmatpush.msra.mxu0 0.0
      %314 = vmatpush.msra.mxu0 0.0
      %315 = vmatpush.msra.mxu0 0.0
      %316 = vmatpush.msra.mxu0 0.0
      %317 = vmatpush.msra.mxu0 0.0
      %318 = vmatpush.msra.mxu0 %v266
      %319 = vmatmul.f32.gmra.mxu0 %v271
      %v320 = vpop.f32.mrf.mxu0
      %v321 = vadd.f32 %v268, %v320
      %322 = vmatmul.f32.gmra.mxu0 %v274
      %v323 = vpop.f32.mrf.mxu0
      %v324 = vadd.f32 %v268, %v323
      %325 = vmatmul.f32.gmra.mxu0 %v277
      %v326 = vpop.f32.mrf.mxu0
      %v327 = vadd.f32 %v268, %v326
      %328 = vmatmul.f32.gmra.mxu0 %v280
      %v329 = vpop.f32.mrf.mxu0
      %v330 = vadd.f32 %v268, %v329
      %331 = vmatmul.f32.gmra.mxu0 %v283
      %v332 = vpop.f32.mrf.mxu0
      %v333 = vadd.f32 %v268, %v332
      %334 = vmatmul.f32.gmra.mxu0 %v286
      %v335 = vpop.f32.mrf.mxu0
      %v336 = vadd.f32 %v268, %v335
      %337 = vmatmul.f32.gmra.mxu0 %v289
      %v338 = vpop.f32.mrf.mxu0
      %v339 = vadd.f32 %v268, %v338
      %340 = vmatmul.f32.gmra.mxu0 %v292
      %v341 = vpop.f32.mrf.mxu0
      %v342 = vadd.f32 %v268, %v341
      %343 = vmatmul.f32.gmra.mxu0 %v295
      %v344 = vpop.f32.mrf.mxu0
      %v345 = vadd.f32 %v268, %v344
      %346 = vmatmul.f32.gmra.mxu0 %v298
      %v347 = vpop.f32.mrf.mxu0
      %v348 = vadd.f32 %v268, %v347
      %349 = vmatmul.f32.gmra.mxu0 %v301
      %v350 = vpop.f32.mrf.mxu0
      %v351 = vadd.f32 %v268, %v350
      %352 = vdwg.mxu0
      %v353 = vmax.f32 %v321, 0.0
      %v354 = vmax.f32 %v324, 0.0
      %v355 = vmax.f32 %v327, 0.0
      %v356 = vmax.f32 %v330, 0.0
      %v357 = vmax.f32 %v333, 0.0
      %v358 = vmax.f32 %v336, 0.0
      %v359 = vmax.f32 %v339, 0.0
      %v360 = vmax.f32 %v342, 0.0
      %v361 = vmax.f32 %v345, 0.0
      %v362 = vmax.f32 %v348, 0.0
      %v363 = vmax.f32 %v351, 0.0
      %v364 = vld [vmem:[%s2] sm:$0xff]
      %v365 = vld [vmem:[%s2 + $0x8] sm:$0xff]
      %v366 = vld [vmem:[%s2 + $0x10] sm:$0xff]
      %v367 = vld [vmem:[%s2 + $0x18] sm:$0xff]
      %v368 = vld [vmem:[%s2 + $0x20] sm:$0xff]
      %v369 = vld [vmem:[%s2 + $0x28] sm:$0xff]
      %v370 = vld [vmem:[%s2 + $0x30] sm:$0xff]
      %v371 = vld [vmem:[%s2 + $0x38] sm:$0xff]
      %v372 = vld [vmem:[%s3 + $0x1] sm:$0x1]
      %v373 = vperm.slane %v372, 0
      %vm374 = vcmask 523264
      %v376 = vsel %vm374, %v353, 0
      %v379 = vsel %vm374, %v354, 0
      %v382 = vsel %vm374, %v355, 0
      %v385 = vsel %vm374, %v356, 0
      %v388 = vsel %vm374, %v357, 0
      %v391 = vsel %vm374, %v358, 0
      %v394 = vsel %vm374, %v359, 0
      %v397 = vsel %vm374, %v360, 0
      %v400 = vsel %vm374, %v361, 0
      %v403 = vsel %vm374, %v362, 0
      %v406 = vsel %vm374, %v363, 0
      %408 = vmatpush.msra.mxu0 0.0
      %409 = vmatpush.msra.mxu0 0.0
      %410 = vmatpush.msra.mxu0 0.0
      %411 = vmatpush.msra.mxu0 0.0
      %412 = vmatpush.msra.mxu0 0.0
      %413 = vmatpush.msra.mxu0 0.0
      %414 = vmatpush.msra.mxu0 0.0
      %415 = vmatpush.msra.mxu0 0.0
      %416 = vmatpush.msra.mxu0 %v371
      %417 = vmatpush.msra.mxu0 %v370
      %418 = vmatpush.msra.mxu0 %v369
      %419 = vmatpush.msra.mxu0 %v368
      %420 = vmatpush.msra.mxu0 %v367
      %421 = vmatpush.msra.mxu0 %v366
      %422 = vmatpush.msra.mxu0 %v365
      %423 = vmatpush.msra.mxu0 %v364
      %424 = vmatmul.f32.gmra.mxu0 %v376
      %v425 = vpop.f32.mrf.mxu0
      %v426 = vadd.f32 %v373, %v425
      %427 = vmatmul.f32.gmra.mxu0 %v379
      %v428 = vpop.f32.mrf.mxu0
      %v429 = vadd.f32 %v373, %v428
      %430 = vmatmul.f32.gmra.mxu0 %v382
      %v431 = vpop.f32.mrf.mxu0
      %v432 = vadd.f32 %v373, %v431
      %433 = vmatmul.f32.gmra.mxu0 %v385
      %v434 = vpop.f32.mrf.mxu0
      %v435 = vadd.f32 %v373, %v434
      %436 = vmatmul.f32.gmra.mxu0 %v388
      %v437 = vpop.f32.mrf.mxu0
      %v438 = vadd.f32 %v373, %v437
      %439 = vmatmul.f32.gmra.mxu0 %v391
      %v440 = vpop.f32.mrf.mxu0
      %v441 = vadd.f32 %v373, %v440
      %442 = vmatmul.f32.gmra.mxu0 %v394
      %v443 = vpop.f32.mrf.mxu0
      %v444 = vadd.f32 %v373, %v443
      %445 = vmatmul.f32.gmra.mxu0 %v397
      %v446 = vpop.f32.mrf.mxu0
      %v447 = vadd.f32 %v373, %v446
      %448 = vmatmul.f32.gmra.mxu0 %v400
      %v449 = vpop.f32.mrf.mxu0
      %v450 = vadd.f32 %v373, %v449
      %451 = vmatmul.f32.gmra.mxu0 %v403
      %v452 = vpop.f32.mrf.mxu0
      %v453 = vadd.f32 %v373, %v452
      %454 = vmatmul.f32.gmra.mxu0 %v406
      %v455 = vpop.f32.mrf.mxu0
      %v456 = vadd.f32 %v373, %v455
      %457 = vdwg.mxu0
      %v458 = vmax.f32 %v426, 0.0
      %v459 = vmax.f32 %v429, 0.0
      %v460 = vmax.f32 %v432, 0.0
      %v461 = vmax.f32 %v435, 0.0
      %v462 = vmax.f32 %v438, 0.0
      %v463 = vmax.f32 %v441, 0.0
      %v464 = vmax.f32 %v444, 0.0
      %v465 = vmax.f32 %v447, 0.0
      %v466 = vmax.f32 %v450, 0.0
      %v467 = vmax.f32 %v453, 0.0
      %v468 = vmax.f32 %v456, 0.0
      %s469 = scalar_lea.vmem %s2, 64
      %v470 = vld [vmem:[%s469] sm:$0xff]
      %v471 = vld [vmem:[%s469 + $0x8] sm:$0xff]
      %v472 = vld [vmem:[%s469 + $0x10] sm:$0xff]
      %v473 = vld [vmem:[%s469 + $0x18] sm:$0xff]
      %v474 = vld [vmem:[%s469 + $0x20] sm:$0xff]
      %v475 = vld [vmem:[%s469 + $0x28] sm:$0xff]
      %v476 = vld [vmem:[%s469 + $0x30] sm:$0xff]
      %v477 = vld [vmem:[%s469 + $0x38] sm:$0xff]
      %v478 = vld [vmem:[%s3 + $0x2] sm:$0x1]
      %v479 = vperm.slane %v478, 0
      %v481 = vsel %vm374, %v458, 0
      %v484 = vsel %vm374, %v459, 0
      %v487 = vsel %vm374, %v460, 0
      %v490 = vsel %vm374, %v461, 0
      %v493 = vsel %vm374, %v462, 0
      %v496 = vsel %vm374, %v463, 0
      %v499 = vsel %vm374, %v464, 0
      %v502 = vsel %vm374, %v465, 0
      %v505 = vsel %vm374, %v466, 0
      %v508 = vsel %vm374, %v467, 0
      %v511 = vsel %vm374, %v468, 0
      %513 = vmatpush.msra.mxu0 0.0
      %514 = vmatpush.msra.mxu0 0.0
      %515 = vmatpush.msra.mxu0 0.0
      %516 = vmatpush.msra.mxu0 0.0
      %517 = vmatpush.msra.mxu0 0.0
      %518 = vmatpush.msra.mxu0 0.0
      %519 = vmatpush.msra.mxu0 0.0
      %520 = vmatpush.msra.mxu0 0.0
      %521 = vmatpush.msra.mxu0 %v477
      %522 = vmatpush.msra.mxu0 %v476
      %523 = vmatpush.msra.mxu0 %v475
      %524 = vmatpush.msra.mxu0 %v474
      %525 = vmatpush.msra.mxu0 %v473
      %526 = vmatpush.msra.mxu0 %v472
      %527 = vmatpush.msra.mxu0 %v471
      %528 = vmatpush.msra.mxu0 %v470
      %529 = vmatmul.f32.gmra.mxu0 %v481
      %v530 = vpop.f32.mrf.mxu0
      %v531 = vadd.f32 %v479, %v530
      %532 = vmatmul.f32.gmra.mxu0 %v484
      %v533 = vpop.f32.mrf.mxu0
      %v534 = vadd.f32 %v479, %v533
      %535 = vmatmul.f32.gmra.mxu0 %v487
      %v536 = vpop.f32.mrf.mxu0
      %v537 = vadd.f32 %v479, %v536
      %538 = vmatmul.f32.gmra.mxu0 %v490
      %v539 = vpop.f32.mrf.mxu0
      %v540 = vadd.f32 %v479, %v539
      %541 = vmatmul.f32.gmra.mxu0 %v493
      %v542 = vpop.f32.mrf.mxu0
      %v543 = vadd.f32 %v479, %v542
      %544 = vmatmul.f32.gmra.mxu0 %v496
      %v545 = vpop.f32.mrf.mxu0
      %v546 = vadd.f32 %v479, %v545
      %547 = vmatmul.f32.gmra.mxu0 %v499
      %v548 = vpop.f32.mrf.mxu0
      %v549 = vadd.f32 %v479, %v548
      %550 = vmatmul.f32.gmra.mxu0 %v502
      %v551 = vpop.f32.mrf.mxu0
      %v552 = vadd.f32 %v479, %v551
      %553 = vmatmul.f32.gmra.mxu0 %v505
      %v554 = vpop.f32.mrf.mxu0
      %v555 = vadd.f32 %v479, %v554
      %556 = vmatmul.f32.gmra.mxu0 %v508
      %v557 = vpop.f32.mrf.mxu0
      %v558 = vadd.f32 %v479, %v557
      %559 = vmatmul.f32.gmra.mxu0 %v511
      %v560 = vpop.f32.mrf.mxu0
      %v561 = vadd.f32 %v479, %v560
      %562 = vdwg.mxu0
      %v563 = vmax.f32 %v531, 0.0
      %v564 = vmax.f32 %v534, 0.0
      %v565 = vmax.f32 %v537, 0.0
      %v566 = vmax.f32 %v540, 0.0
      %v567 = vmax.f32 %v543, 0.0
      %v568 = vmax.f32 %v546, 0.0
      %v569 = vmax.f32 %v549, 0.0
      %v570 = vmax.f32 %v552, 0.0
      %v571 = vmax.f32 %v555, 0.0
      %v572 = vmax.f32 %v558, 0.0
      %v573 = vmax.f32 %v561, 0.0
      %s574 = scalar_lea.vmem %s2, 128
      %v575 = vld [vmem:[%s574] sm:$0xff]
      %v576 = vld [vmem:[%s574 + $0x8] sm:$0xff]
      %v577 = vld [vmem:[%s574 + $0x10] sm:$0xff]
      %v578 = vld [vmem:[%s574 + $0x18] sm:$0xff]
      %v579 = vld [vmem:[%s574 + $0x20] sm:$0xff]
      %v580 = vld [vmem:[%s574 + $0x28] sm:$0xff]
      %v581 = vld [vmem:[%s574 + $0x30] sm:$0xff]
      %v582 = vld [vmem:[%s574 + $0x38] sm:$0xff]
      %v583 = vld [vmem:[%s3 + $0x3] sm:$0x1]
      %v584 = vperm.slane %v583, 0
      %v586 = vsel %vm374, %v563, 0
      %v589 = vsel %vm374, %v564, 0
      %v592 = vsel %vm374, %v565, 0
      %v595 = vsel %vm374, %v566, 0
      %v598 = vsel %vm374, %v567, 0
      %v601 = vsel %vm374, %v568, 0
      %v604 = vsel %vm374, %v569, 0
      %v607 = vsel %vm374, %v570, 0
      %v610 = vsel %vm374, %v571, 0
      %v613 = vsel %vm374, %v572, 0
      %v616 = vsel %vm374, %v573, 0
      %618 = vmatpush.msra.mxu0 0.0
      %619 = vmatpush.msra.mxu0 0.0
      %620 = vmatpush.msra.mxu0 0.0
      %621 = vmatpush.msra.mxu0 0.0
      %622 = vmatpush.msra.mxu0 0.0
      %623 = vmatpush.msra.mxu0 0.0
      %624 = vmatpush.msra.mxu0 0.0
      %625 = vmatpush.msra.mxu0 0.0
      %626 = vmatpush.msra.mxu0 %v582
      %627 = vmatpush.msra.mxu0 %v581
      %628 = vmatpush.msra.mxu0 %v580
      %629 = vmatpush.msra.mxu0 %v579
      %630 = vmatpush.msra.mxu0 %v578
      %631 = vmatpush.msra.mxu0 %v577
      %632 = vmatpush.msra.mxu0 %v576
      %633 = vmatpush.msra.mxu0 %v575
      %634 = vmatmul.f32.gmra.mxu0 %v586
      %v635 = vpop.f32.mrf.mxu0
      %v636 = vadd.f32 %v584, %v635
      %637 = vmatmul.f32.gmra.mxu0 %v589
      %v638 = vpop.f32.mrf.mxu0
      %v639 = vadd.f32 %v584, %v638
      %640 = vmatmul.f32.gmra.mxu0 %v592
      %v641 = vpop.f32.mrf.mxu0
      %v642 = vadd.f32 %v584, %v641
      %643 = vmatmul.f32.gmra.mxu0 %v595
      %v644 = vpop.f32.mrf.mxu0
      %v645 = vadd.f32 %v584, %v644
      %646 = vmatmul.f32.gmra.mxu0 %v598
      %v647 = vpop.f32.mrf.mxu0
      %v648 = vadd.f32 %v584, %v647
      %649 = vmatmul.f32.gmra.mxu0 %v601
      %v650 = vpop.f32.mrf.mxu0
      %v651 = vadd.f32 %v584, %v650
      %652 = vmatmul.f32.gmra.mxu0 %v604
      %v653 = vpop.f32.mrf.mxu0
      %v654 = vadd.f32 %v584, %v653
      %655 = vmatmul.f32.gmra.mxu0 %v607
      %v656 = vpop.f32.mrf.mxu0
      %v657 = vadd.f32 %v584, %v656
      %658 = vmatmul.f32.gmra.mxu0 %v610
      %v659 = vpop.f32.mrf.mxu0
      %v660 = vadd.f32 %v584, %v659
      %661 = vmatmul.f32.gmra.mxu0 %v613
      %v662 = vpop.f32.mrf.mxu0
      %v663 = vadd.f32 %v584, %v662
      %664 = vmatmul.f32.gmra.mxu0 %v616
      %v665 = vpop.f32.mrf.mxu0
      %v666 = vadd.f32 %v584, %v665
      %667 = vdwg.mxu0
      %v668 = vmax.f32 %v636, 0.0
      %v669 = vmax.f32 %v639, 0.0
      %v670 = vmax.f32 %v642, 0.0
      %v671 = vmax.f32 %v645, 0.0
      %v672 = vmax.f32 %v648, 0.0
      %v673 = vmax.f32 %v651, 0.0
      %v674 = vmax.f32 %v654, 0.0
      %v675 = vmax.f32 %v657, 0.0
      %v676 = vmax.f32 %v660, 0.0
      %v677 = vmax.f32 %v663, 0.0
      %v678 = vmax.f32 %v666, 0.0
      %s679 = scalar_lea.vmem %s2, 192
      %v680 = vld [vmem:[%s679] sm:$0xff]
      %v681 = vld [vmem:[%s679 + $0x8] sm:$0xff]
      %v682 = vld [vmem:[%s679 + $0x10] sm:$0xff]
      %v683 = vld [vmem:[%s679 + $0x18] sm:$0xff]
      %v684 = vld [vmem:[%s679 + $0x20] sm:$0xff]
      %v685 = vld [vmem:[%s679 + $0x28] sm:$0xff]
      %v686 = vld [vmem:[%s679 + $0x30] sm:$0xff]
      %v687 = vld [vmem:[%s679 + $0x38] sm:$0xff]
      %v688 = vld [vmem:[%s3 + $0x4] sm:$0x1]
      %v689 = vperm.slane %v688, 0
      %v691 = vsel %vm374, %v668, 0
      %v694 = vsel %vm374, %v669, 0
      %v697 = vsel %vm374, %v670, 0
      %v700 = vsel %vm374, %v671, 0
      %v703 = vsel %vm374, %v672, 0
      %v706 = vsel %vm374, %v673, 0
      %v709 = vsel %vm374, %v674, 0
      %v712 = vsel %vm374, %v675, 0
      %v715 = vsel %vm374, %v676, 0
      %v718 = vsel %vm374, %v677, 0
      %v721 = vsel %vm374, %v678, 0
      %723 = vmatpush.msra.mxu0 0.0
      %724 = vmatpush.msra.mxu0 0.0
      %725 = vmatpush.msra.mxu0 0.0
      %726 = vmatpush.msra.mxu0 0.0
      %727 = vmatpush.msra.mxu0 0.0
      %728 = vmatpush.msra.mxu0 0.0
      %729 = vmatpush.msra.mxu0 0.0
      %730 = vmatpush.msra.mxu0 0.0
      %731 = vmatpush.msra.mxu0 %v687
      %732 = vmatpush.msra.mxu0 %v686
      %733 = vmatpush.msra.mxu0 %v685
      %734 = vmatpush.msra.mxu0 %v684
      %735 = vmatpush.msra.mxu0 %v683
      %736 = vmatpush.msra.mxu0 %v682
      %737 = vmatpush.msra.mxu0 %v681
      %738 = vmatpush.msra.mxu0 %v680
      %739 = vmatmul.f32.gmra.mxu0 %v691
      %v740 = vpop.f32.mrf.mxu0
      %v741 = vadd.f32 %v689, %v740
      %742 = vmatmul.f32.gmra.mxu0 %v694
      %v743 = vpop.f32.mrf.mxu0
      %v744 = vadd.f32 %v689, %v743
      %745 = vmatmul.f32.gmra.mxu0 %v697
      %v746 = vpop.f32.mrf.mxu0
      %v747 = vadd.f32 %v689, %v746
      %748 = vmatmul.f32.gmra.mxu0 %v700
      %v749 = vpop.f32.mrf.mxu0
      %v750 = vadd.f32 %v689, %v749
      %751 = vmatmul.f32.gmra.mxu0 %v703
      %v752 = vpop.f32.mrf.mxu0
      %v753 = vadd.f32 %v689, %v752
      %754 = vmatmul.f32.gmra.mxu0 %v706
      %v755 = vpop.f32.mrf.mxu0
      %v756 = vadd.f32 %v689, %v755
      %757 = vmatmul.f32.gmra.mxu0 %v709
      %v758 = vpop.f32.mrf.mxu0
      %v759 = vadd.f32 %v689, %v758
      %760 = vmatmul.f32.gmra.mxu0 %v712
      %v761 = vpop.f32.mrf.mxu0
      %v762 = vadd.f32 %v689, %v761
      %763 = vmatmul.f32.gmra.mxu0 %v715
      %v764 = vpop.f32.mrf.mxu0
      %v765 = vadd.f32 %v689, %v764
      %766 = vmatmul.f32.gmra.mxu0 %v718
      %v767 = vpop.f32.mrf.mxu0
      %v768 = vadd.f32 %v689, %v767
      %769 = vmatmul.f32.gmra.mxu0 %v721
      %v770 = vpop.f32.mrf.mxu0
      %v771 = vadd.f32 %v689, %v770
      %772 = vdwg.mxu0
      %v773 = vmax.f32 %v741, 0.0
      %v774 = vmax.f32 %v744, 0.0
      %v775 = vmax.f32 %v747, 0.0
      %v776 = vmax.f32 %v750, 0.0
      %v777 = vmax.f32 %v753, 0.0
      %v778 = vmax.f32 %v756, 0.0
      %v779 = vmax.f32 %v759, 0.0
      %v780 = vmax.f32 %v762, 0.0
      %v781 = vmax.f32 %v765, 0.0
      %v782 = vmax.f32 %v768, 0.0
      %v783 = vmax.f32 %v771, 0.0
      %v784 = vld [vmem:[%s5] sm:$0xff]
      %785 = vset.pattern.permute.xlu0 4
      %786 = vperm.xlu0 %785, %v255
      %v787 = vpop.permute.xlu0 %786
      %789 = vset.pattern.permute.xlu0 4
      %790 = vperm.xlu0 %789, %v256
      %v791 = vpop.permute.xlu0 %790
      %793 = vset.pattern.permute.xlu0 4
      %794 = vperm.xlu0 %793, %v257
      %v795 = vpop.permute.xlu0 %794
      %797 = vset.pattern.permute.xlu0 4
      %798 = vperm.xlu0 %797, %v258
      %v799 = vpop.permute.xlu0 %798
      %801 = vset.pattern.permute.xlu0 4
      %802 = vperm.xlu0 %801, %v259
      %v803 = vpop.permute.xlu0 %802
      %805 = vset.pattern.permute.xlu0 4
      %806 = vperm.xlu0 %805, %v260
      %v807 = vpop.permute.xlu0 %806
      %809 = vset.pattern.permute.xlu0 4
      %810 = vperm.xlu0 %809, %v261
      %v811 = vpop.permute.xlu0 %810
      %813 = vset.pattern.permute.xlu0 4
      %814 = vperm.xlu0 %813, %v262
      %v815 = vpop.permute.xlu0 %814
      %817 = vset.pattern.permute.xlu0 4
      %818 = vperm.xlu0 %817, %v263
      %v819 = vpop.permute.xlu0 %818
      %821 = vset.pattern.permute.xlu0 4
      %822 = vperm.xlu0 %821, %v264
      %v823 = vpop.permute.xlu0 %822
      %825 = vset.pattern.permute.xlu0 4
      %826 = vperm.xlu0 %825, %v265
      %v827 = vpop.permute.xlu0 %826
      %v829 = vmul.f32 %v458, %v787
      %v830 = vmul.f32 %v459, %v791
      %v831 = vmul.f32 %v460, %v795
      %v832 = vmul.f32 %v461, %v799
      %v833 = vmul.f32 %v462, %v803
      %v834 = vmul.f32 %v463, %v807
      %v835 = vmul.f32 %v464, %v811
      %v836 = vmul.f32 %v465, %v815
      %v837 = vmul.f32 %v466, %v819
      %v838 = vmul.f32 %v467, %v823
      %v839 = vmul.f32 %v468, %v827
      %v840 = vld [vmem:[%s4] sm:$0xff]
      %v841 = vld [vmem:[%s4 + $0x8] sm:$0xff]
      %v842 = vld [vmem:[%s4 + $0x10] sm:$0xff]
      %v843 = vld [vmem:[%s4 + $0x18] sm:$0xff]
      %v844 = vld [vmem:[%s4 + $0x20] sm:$0xff]
      %v845 = vld [vmem:[%s4 + $0x28] sm:$0xff]
      %v846 = vld [vmem:[%s4 + $0x30] sm:$0xff]
      %v847 = vld [vmem:[%s4 + $0x38] sm:$0xff]
      %v849 = vsel %vm374, %v829, 0
      %v852 = vsel %vm374, %v830, 0
      %v855 = vsel %vm374, %v831, 0
      %v858 = vsel %vm374, %v832, 0
      %v861 = vsel %vm374, %v833, 0
      %v864 = vsel %vm374, %v834, 0
      %v867 = vsel %vm374, %v835, 0
      %v870 = vsel %vm374, %v836, 0
      %v873 = vsel %vm374, %v837, 0
      %v876 = vsel %vm374, %v838, 0
      %v879 = vsel %vm374, %v839, 0
      %881 = vmatpush.msra.mxu0 0.0
      %882 = vmatpush.msra.mxu0 0.0
      %883 = vmatpush.msra.mxu0 0.0
      %884 = vmatpush.msra.mxu0 0.0
      %885 = vmatpush.msra.mxu0 0.0
      %886 = vmatpush.msra.mxu0 0.0
      %887 = vmatpush.msra.mxu0 0.0
      %888 = vmatpush.msra.mxu0 0.0
      %889 = vmatpush.msra.mxu0 %v847
      %890 = vmatpush.msra.mxu0 %v846
      %891 = vmatpush.msra.mxu0 %v845
      %892 = vmatpush.msra.mxu0 %v844
      %893 = vmatpush.msra.mxu0 %v843
      %894 = vmatpush.msra.mxu0 %v842
      %895 = vmatpush.msra.mxu0 %v841
      %896 = vmatpush.msra.mxu0 %v840
      %897 = vmatmul.f32.gmra.mxu0 %v849
      %v898 = vpop.f32.mrf.mxu0
      %v899 = vadd.f32 0.0, %v898
      %900 = vmatmul.f32.gmra.mxu0 %v852
      %v901 = vpop.f32.mrf.mxu0
      %v902 = vadd.f32 0.0, %v901
      %903 = vmatmul.f32.gmra.mxu0 %v855
      %v904 = vpop.f32.mrf.mxu0
      %v905 = vadd.f32 0.0, %v904
      %906 = vmatmul.f32.gmra.mxu0 %v858
      %v907 = vpop.f32.mrf.mxu0
      %v908 = vadd.f32 0.0, %v907
      %909 = vmatmul.f32.gmra.mxu0 %v861
      %v910 = vpop.f32.mrf.mxu0
      %v911 = vadd.f32 0.0, %v910
      %912 = vmatmul.f32.gmra.mxu0 %v864
      %v913 = vpop.f32.mrf.mxu0
      %v914 = vadd.f32 0.0, %v913
      %915 = vmatmul.f32.gmra.mxu0 %v867
      %v916 = vpop.f32.mrf.mxu0
      %v917 = vadd.f32 0.0, %v916
      %918 = vmatmul.f32.gmra.mxu0 %v870
      %v919 = vpop.f32.mrf.mxu0
      %v920 = vadd.f32 0.0, %v919
      %921 = vmatmul.f32.gmra.mxu0 %v873
      %v922 = vpop.f32.mrf.mxu0
      %v923 = vadd.f32 0.0, %v922
      %924 = vmatmul.f32.gmra.mxu0 %v876
      %v925 = vpop.f32.mrf.mxu0
      %v926 = vadd.f32 0.0, %v925
      %927 = vmatmul.f32.gmra.mxu0 %v879
      %v928 = vpop.f32.mrf.mxu0
      %v929 = vadd.f32 0.0, %v928
      %930 = vdwg.mxu0
      %931 = vmatpush.msra.mxu0 0.0
      %932 = vmatpush.msra.mxu0 0.0
      %933 = vmatpush.msra.mxu0 0.0
      %934 = vmatpush.msra.mxu0 0.0
      %935 = vmatpush.msra.mxu0 0.0
      %936 = vmatpush.msra.mxu0 0.0
      %937 = vmatpush.msra.mxu0 0.0
      %938 = vmatpush.msra.mxu0 0.0
      %939 = vmatpush.msra.mxu0 0.0
      %940 = vmatpush.msra.mxu0 0.0
      %941 = vmatpush.msra.mxu0 0.0
      %942 = vmatpush.msra.mxu0 0.0
      %943 = vmatpush.msra.mxu0 0.0
      %944 = vmatpush.msra.mxu0 0.0
      %945 = vmatpush.msra.mxu0 0.0
      %946 = vmatpush.msra.mxu0 %v784
      %947 = vmatmul.f32.gmra.mxu0 %v271
      %v948 = vpop.f32.mrf.mxu0
      %v949 = vadd.f32 %v899, %v948
      %950 = vmatmul.f32.gmra.mxu0 %v274
      %v951 = vpop.f32.mrf.mxu0
      %v952 = vadd.f32 %v902, %v951
      %953 = vmatmul.f32.gmra.mxu0 %v277
      %v954 = vpop.f32.mrf.mxu0
      %v955 = vadd.f32 %v905, %v954
      %956 = vmatmul.f32.gmra.mxu0 %v280
      %v957 = vpop.f32.mrf.mxu0
      %v958 = vadd.f32 %v908, %v957
      %959 = vmatmul.f32.gmra.mxu0 %v283
      %v960 = vpop.f32.mrf.mxu0
      %v961 = vadd.f32 %v911, %v960
      %962 = vmatmul.f32.gmra.mxu0 %v286
      %v963 = vpop.f32.mrf.mxu0
      %v964 = vadd.f32 %v914, %v963
      %965 = vmatmul.f32.gmra.mxu0 %v289
      %v966 = vpop.f32.mrf.mxu0
      %v967 = vadd.f32 %v917, %v966
      %968 = vmatmul.f32.gmra.mxu0 %v292
      %v969 = vpop.f32.mrf.mxu0
      %v970 = vadd.f32 %v920, %v969
      %971 = vmatmul.f32.gmra.mxu0 %v295
      %v972 = vpop.f32.mrf.mxu0
      %v973 = vadd.f32 %v923, %v972
      %974 = vmatmul.f32.gmra.mxu0 %v298
      %v975 = vpop.f32.mrf.mxu0
      %v976 = vadd.f32 %v926, %v975
      %977 = vmatmul.f32.gmra.mxu0 %v301
      %v978 = vpop.f32.mrf.mxu0
      %v979 = vadd.f32 %v929, %v978
      %980 = vdwg.mxu0
      %981 = vset.pattern.permute.xlu0 5
      %982 = vperm.xlu0 %981, %v255
      %v983 = vpop.permute.xlu0 %982
      %985 = vset.pattern.permute.xlu0 5
      %986 = vperm.xlu0 %985, %v256
      %v987 = vpop.permute.xlu0 %986
      %989 = vset.pattern.permute.xlu0 5
      %990 = vperm.xlu0 %989, %v257
      %v991 = vpop.permute.xlu0 %990
      %993 = vset.pattern.permute.xlu0 5
      %994 = vperm.xlu0 %993, %v258
      %v995 = vpop.permute.xlu0 %994
      %997 = vset.pattern.permute.xlu0 5
      %998 = vperm.xlu0 %997, %v259
      %v999 = vpop.permute.xlu0 %998
      %1001 = vset.pattern.permute.xlu0 5
      %1002 = vperm.xlu0 %1001, %v260
      %v1003 = vpop.permute.xlu0 %1002
      %1005 = vset.pattern.permute.xlu0 5
      %1006 = vperm.xlu0 %1005, %v261
      %v1007 = vpop.permute.xlu0 %1006
      %1009 = vset.pattern.permute.xlu0 5
      %1010 = vperm.xlu0 %1009, %v262
      %v1011 = vpop.permute.xlu0 %1010
      %1013 = vset.pattern.permute.xlu0 5
      %1014 = vperm.xlu0 %1013, %v263
      %v1015 = vpop.permute.xlu0 %1014
      %1017 = vset.pattern.permute.xlu0 5
      %1018 = vperm.xlu0 %1017, %v264
      %v1019 = vpop.permute.xlu0 %1018
      %1021 = vset.pattern.permute.xlu0 5
      %1022 = vperm.xlu0 %1021, %v265
      %v1023 = vpop.permute.xlu0 %1022
      %v1025 = vmul.f32 %v563, %v983
      %v1026 = vmul.f32 %v564, %v987
      %v1027 = vmul.f32 %v565, %v991
      %v1028 = vmul.f32 %v566, %v995
      %v1029 = vmul.f32 %v567, %v999
      %v1030 = vmul.f32 %v568, %v1003
      %v1031 = vmul.f32 %v569, %v1007
      %v1032 = vmul.f32 %v570, %v1011
      %v1033 = vmul.f32 %v571, %v1015
      %v1034 = vmul.f32 %v572, %v1019
      %v1035 = vmul.f32 %v573, %v1023
      %s1036 = scalar_lea.vmem %s4, 64
      %v1037 = vld [vmem:[%s1036] sm:$0xff]
      %v1038 = vld [vmem:[%s1036 + $0x8] sm:$0xff]
      %v1039 = vld [vmem:[%s1036 + $0x10] sm:$0xff]
      %v1040 = vld [vmem:[%s1036 + $0x18] sm:$0xff]
      %v1041 = vld [vmem:[%s1036 + $0x20] sm:$0xff]
      %v1042 = vld [vmem:[%s1036 + $0x28] sm:$0xff]
      %v1043 = vld [vmem:[%s1036 + $0x30] sm:$0xff]
      %v1044 = vld [vmem:[%s1036 + $0x38] sm:$0xff]
      %v1046 = vsel %vm374, %v1025, 0
      %v1049 = vsel %vm374, %v1026, 0
      %v1052 = vsel %vm374, %v1027, 0
      %v1055 = vsel %vm374, %v1028, 0
      %v1058 = vsel %vm374, %v1029, 0
      %v1061 = vsel %vm374, %v1030, 0
      %v1064 = vsel %vm374, %v1031, 0
      %v1067 = vsel %vm374, %v1032, 0
      %v1070 = vsel %vm374, %v1033, 0
      %v1073 = vsel %vm374, %v1034, 0
      %v1076 = vsel %vm374, %v1035, 0
      %1078 = vmatpush.msra.mxu0 0.0
      %1079 = vmatpush.msra.mxu0 0.0
      %1080 = vmatpush.msra.mxu0 0.0
      %1081 = vmatpush.msra.mxu0 0.0
      %1082 = vmatpush.msra.mxu0 0.0
      %1083 = vmatpush.msra.mxu0 0.0
      %1084 = vmatpush.msra.mxu0 0.0
      %1085 = vmatpush.msra.mxu0 0.0
      %1086 = vmatpush.msra.mxu0 %v1044
      %1087 = vmatpush.msra.mxu0 %v1043
      %1088 = vmatpush.msra.mxu0 %v1042
      %1089 = vmatpush.msra.mxu0 %v1041
      %1090 = vmatpush.msra.mxu0 %v1040
      %1091 = vmatpush.msra.mxu0 %v1039
      %1092 = vmatpush.msra.mxu0 %v1038
      %1093 = vmatpush.msra.mxu0 %v1037
      %1094 = vmatmul.f32.gmra.mxu0 %v1046
      %v1095 = vpop.f32.mrf.mxu0
      %v1096 = vadd.f32 0.0, %v1095
      %1097 = vmatmul.f32.gmra.mxu0 %v1049
      %v1098 = vpop.f32.mrf.mxu0
      %v1099 = vadd.f32 0.0, %v1098
      %1100 = vmatmul.f32.gmra.mxu0 %v1052
      %v1101 = vpop.f32.mrf.mxu0
      %v1102 = vadd.f32 0.0, %v1101
      %1103 = vmatmul.f32.gmra.mxu0 %v1055
      %v1104 = vpop.f32.mrf.mxu0
      %v1105 = vadd.f32 0.0, %v1104
      %1106 = vmatmul.f32.gmra.mxu0 %v1058
      %v1107 = vpop.f32.mrf.mxu0
      %v1108 = vadd.f32 0.0, %v1107
      %1109 = vmatmul.f32.gmra.mxu0 %v1061
      %v1110 = vpop.f32.mrf.mxu0
      %v1111 = vadd.f32 0.0, %v1110
      %1112 = vmatmul.f32.gmra.mxu0 %v1064
      %v1113 = vpop.f32.mrf.mxu0
      %v1114 = vadd.f32 0.0, %v1113
      %1115 = vmatmul.f32.gmra.mxu0 %v1067
      %v1116 = vpop.f32.mrf.mxu0
      %v1117 = vadd.f32 0.0, %v1116
      %1118 = vmatmul.f32.gmra.mxu0 %v1070
      %v1119 = vpop.f32.mrf.mxu0
      %v1120 = vadd.f32 0.0, %v1119
      %1121 = vmatmul.f32.gmra.mxu0 %v1073
      %v1122 = vpop.f32.mrf.mxu0
      %v1123 = vadd.f32 0.0, %v1122
      %1124 = vmatmul.f32.gmra.mxu0 %v1076
      %v1125 = vpop.f32.mrf.mxu0
      %v1126 = vadd.f32 0.0, %v1125
      %1127 = vdwg.mxu0
      %v1128 = vadd.f32 %v949, %v1096
      %v1129 = vadd.f32 %v952, %v1099
      %v1130 = vadd.f32 %v955, %v1102
      %v1131 = vadd.f32 %v958, %v1105
      %v1132 = vadd.f32 %v961, %v1108
      %v1133 = vadd.f32 %v964, %v1111
      %v1134 = vadd.f32 %v967, %v1114
      %v1135 = vadd.f32 %v970, %v1117
      %v1136 = vadd.f32 %v973, %v1120
      %v1137 = vadd.f32 %v976, %v1123
      %v1138 = vadd.f32 %v979, %v1126
      %1139 = vset.pattern.permute.xlu0 6
      %1140 = vperm.xlu0 %1139, %v255
      %v1141 = vpop.permute.xlu0 %1140
      %1143 = vset.pattern.permute.xlu0 6
      %1144 = vperm.xlu0 %1143, %v256
      %v1145 = vpop.permute.xlu0 %1144
      %1147 = vset.pattern.permute.xlu0 6
      %1148 = vperm.xlu0 %1147, %v257
      %v1149 = vpop.permute.xlu0 %1148
      %1151 = vset.pattern.permute.xlu0 6
      %1152 = vperm.xlu0 %1151, %v258
      %v1153 = vpop.permute.xlu0 %1152
      %1155 = vset.pattern.permute.xlu0 6
      %1156 = vperm.xlu0 %1155, %v259
      %v1157 = vpop.permute.xlu0 %1156
      %1159 = vset.pattern.permute.xlu0 6
      %1160 = vperm.xlu0 %1159, %v260
      %v1161 = vpop.permute.xlu0 %1160
      %1163 = vset.pattern.permute.xlu0 6
      %1164 = vperm.xlu0 %1163, %v261
      %v1165 = vpop.permute.xlu0 %1164
      %1167 = vset.pattern.permute.xlu0 6
      %1168 = vperm.xlu0 %1167, %v262
      %v1169 = vpop.permute.xlu0 %1168
      %1171 = vset.pattern.permute.xlu0 6
      %1172 = vperm.xlu0 %1171, %v263
      %v1173 = vpop.permute.xlu0 %1172
      %1175 = vset.pattern.permute.xlu0 6
      %1176 = vperm.xlu0 %1175, %v264
      %v1177 = vpop.permute.xlu0 %1176
      %1179 = vset.pattern.permute.xlu0 6
      %1180 = vperm.xlu0 %1179, %v265
      %v1181 = vpop.permute.xlu0 %1180
      %v1183 = vmul.f32 %v668, %v1141
      %v1184 = vmul.f32 %v669, %v1145
      %v1185 = vmul.f32 %v670, %v1149
      %v1186 = vmul.f32 %v671, %v1153
      %v1187 = vmul.f32 %v672, %v1157
      %v1188 = vmul.f32 %v673, %v1161
      %v1189 = vmul.f32 %v674, %v1165
      %v1190 = vmul.f32 %v675, %v1169
      %v1191 = vmul.f32 %v676, %v1173
      %v1192 = vmul.f32 %v677, %v1177
      %v1193 = vmul.f32 %v678, %v1181
      %s1194 = scalar_lea.vmem %s4, 128
      %v1195 = vld [vmem:[%s1194] sm:$0xff]
      %v1196 = vld [vmem:[%s1194 + $0x8] sm:$0xff]
      %v1197 = vld [vmem:[%s1194 + $0x10] sm:$0xff]
      %v1198 = vld [vmem:[%s1194 + $0x18] sm:$0xff]
      %v1199 = vld [vmem:[%s1194 + $0x20] sm:$0xff]
      %v1200 = vld [vmem:[%s1194 + $0x28] sm:$0xff]
      %v1201 = vld [vmem:[%s1194 + $0x30] sm:$0xff]
      %v1202 = vld [vmem:[%s1194 + $0x38] sm:$0xff]
      %v1204 = vsel %vm374, %v1183, 0
      %v1207 = vsel %vm374, %v1184, 0
      %v1210 = vsel %vm374, %v1185, 0
      %v1213 = vsel %vm374, %v1186, 0
      %v1216 = vsel %vm374, %v1187, 0
      %v1219 = vsel %vm374, %v1188, 0
      %v1222 = vsel %vm374, %v1189, 0
      %v1225 = vsel %vm374, %v1190, 0
      %v1228 = vsel %vm374, %v1191, 0
      %v1231 = vsel %vm374, %v1192, 0
      %v1234 = vsel %vm374, %v1193, 0
      %1236 = vmatpush.msra.mxu0 0.0
      %1237 = vmatpush.msra.mxu0 0.0
      %1238 = vmatpush.msra.mxu0 0.0
      %1239 = vmatpush.msra.mxu0 0.0
      %1240 = vmatpush.msra.mxu0 0.0
      %1241 = vmatpush.msra.mxu0 0.0
      %1242 = vmatpush.msra.mxu0 0.0
      %1243 = vmatpush.msra.mxu0 0.0
      %1244 = vmatpush.msra.mxu0 %v1202
      %1245 = vmatpush.msra.mxu0 %v1201
      %1246 = vmatpush.msra.mxu0 %v1200
      %1247 = vmatpush.msra.mxu0 %v1199
      %1248 = vmatpush.msra.mxu0 %v1198
      %1249 = vmatpush.msra.mxu0 %v1197
      %1250 = vmatpush.msra.mxu0 %v1196
      %1251 = vmatpush.msra.mxu0 %v1195
      %1252 = vmatmul.f32.gmra.mxu0 %v1204
      %v1253 = vpop.f32.mrf.mxu0
      %v1254 = vadd.f32 0.0, %v1253
      %1255 = vmatmul.f32.gmra.mxu0 %v1207
      %v1256 = vpop.f32.mrf.mxu0
      %v1257 = vadd.f32 0.0, %v1256
      %1258 = vmatmul.f32.gmra.mxu0 %v1210
      %v1259 = vpop.f32.mrf.mxu0
      %v1260 = vadd.f32 0.0, %v1259
      %1261 = vmatmul.f32.gmra.mxu0 %v1213
      %v1262 = vpop.f32.mrf.mxu0
      %v1263 = vadd.f32 0.0, %v1262
      %1264 = vmatmul.f32.gmra.mxu0 %v1216
      %v1265 = vpop.f32.mrf.mxu0
      %v1266 = vadd.f32 0.0, %v1265
      %1267 = vmatmul.f32.gmra.mxu0 %v1219
      %v1268 = vpop.f32.mrf.mxu0
      %v1269 = vadd.f32 0.0, %v1268
      %1270 = vmatmul.f32.gmra.mxu0 %v1222
      %v1271 = vpop.f32.mrf.mxu0
      %v1272 = vadd.f32 0.0, %v1271
      %1273 = vmatmul.f32.gmra.mxu0 %v1225
      %v1274 = vpop.f32.mrf.mxu0
      %v1275 = vadd.f32 0.0, %v1274
      %1276 = vmatmul.f32.gmra.mxu0 %v1228
      %v1277 = vpop.f32.mrf.mxu0
      %v1278 = vadd.f32 0.0, %v1277
      %1279 = vmatmul.f32.gmra.mxu0 %v1231
      %v1280 = vpop.f32.mrf.mxu0
      %v1281 = vadd.f32 0.0, %v1280
      %1282 = vmatmul.f32.gmra.mxu0 %v1234
      %v1283 = vpop.f32.mrf.mxu0
      %v1284 = vadd.f32 0.0, %v1283
      %1285 = vdwg.mxu0
      %v1286 = vadd.f32 %v1128, %v1254
      %v1287 = vadd.f32 %v1129, %v1257
      %v1288 = vadd.f32 %v1130, %v1260
      %v1289 = vadd.f32 %v1131, %v1263
      %v1290 = vadd.f32 %v1132, %v1266
      %v1291 = vadd.f32 %v1133, %v1269
      %v1292 = vadd.f32 %v1134, %v1272
      %v1293 = vadd.f32 %v1135, %v1275
      %v1294 = vadd.f32 %v1136, %v1278
      %v1295 = vadd.f32 %v1137, %v1281
      %v1296 = vadd.f32 %v1138, %v1284
      %1297 = vset.pattern.permute.xlu0 7
      %1298 = vperm.xlu0 %1297, %v255
      %v1299 = vpop.permute.xlu0 %1298
      %1301 = vset.pattern.permute.xlu0 7
      %1302 = vperm.xlu0 %1301, %v256
      %v1303 = vpop.permute.xlu0 %1302
      %1305 = vset.pattern.permute.xlu0 7
      %1306 = vperm.xlu0 %1305, %v257
      %v1307 = vpop.permute.xlu0 %1306
      %1309 = vset.pattern.permute.xlu0 7
      %1310 = vperm.xlu0 %1309, %v258
      %v1311 = vpop.permute.xlu0 %1310
      %1313 = vset.pattern.permute.xlu0 7
      %1314 = vperm.xlu0 %1313, %v259
      %v1315 = vpop.permute.xlu0 %1314
      %1317 = vset.pattern.permute.xlu0 7
      %1318 = vperm.xlu0 %1317, %v260
      %v1319 = vpop.permute.xlu0 %1318
      %1321 = vset.pattern.permute.xlu0 7
      %1322 = vperm.xlu0 %1321, %v261
      %v1323 = vpop.permute.xlu0 %1322
      %1325 = vset.pattern.permute.xlu0 7
      %1326 = vperm.xlu0 %1325, %v262
      %v1327 = vpop.permute.xlu0 %1326
      %1329 = vset.pattern.permute.xlu0 7
      %1330 = vperm.xlu0 %1329, %v263
      %v1331 = vpop.permute.xlu0 %1330
      %1333 = vset.pattern.permute.xlu0 7
      %1334 = vperm.xlu0 %1333, %v264
      %v1335 = vpop.permute.xlu0 %1334
      %1337 = vset.pattern.permute.xlu0 7
      %1338 = vperm.xlu0 %1337, %v265
      %v1339 = vpop.permute.xlu0 %1338
      %v1341 = vmul.f32 %v773, %v1299
      %v1342 = vmul.f32 %v774, %v1303
      %v1343 = vmul.f32 %v775, %v1307
      %v1344 = vmul.f32 %v776, %v1311
      %v1345 = vmul.f32 %v777, %v1315
      %v1346 = vmul.f32 %v778, %v1319
      %v1347 = vmul.f32 %v779, %v1323
      %v1348 = vmul.f32 %v780, %v1327
      %v1349 = vmul.f32 %v781, %v1331
      %v1350 = vmul.f32 %v782, %v1335
      %v1351 = vmul.f32 %v783, %v1339
      %s1352 = scalar_lea.vmem %s4, 192
      %v1353 = vld [vmem:[%s1352] sm:$0xff]
      %v1354 = vld [vmem:[%s1352 + $0x8] sm:$0xff]
      %v1355 = vld [vmem:[%s1352 + $0x10] sm:$0xff]
      %v1356 = vld [vmem:[%s1352 + $0x18] sm:$0xff]
      %v1357 = vld [vmem:[%s1352 + $0x20] sm:$0xff]
      %v1358 = vld [vmem:[%s1352 + $0x28] sm:$0xff]
      %v1359 = vld [vmem:[%s1352 + $0x30] sm:$0xff]
      %v1360 = vld [vmem:[%s1352 + $0x38] sm:$0xff]
      %v1362 = vsel %vm374, %v1341, 0
      %v1365 = vsel %vm374, %v1342, 0
      %v1368 = vsel %vm374, %v1343, 0
      %v1371 = vsel %vm374, %v1344, 0
      %v1374 = vsel %vm374, %v1345, 0
      %v1377 = vsel %vm374, %v1346, 0
      %v1380 = vsel %vm374, %v1347, 0
      %v1383 = vsel %vm374, %v1348, 0
      %v1386 = vsel %vm374, %v1349, 0
      %v1389 = vsel %vm374, %v1350, 0
      %v1392 = vsel %vm374, %v1351, 0
      %1394 = vmatpush.msra.mxu0 0.0
      %1395 = vmatpush.msra.mxu0 0.0
      %1396 = vmatpush.msra.mxu0 0.0
      %1397 = vmatpush.msra.mxu0 0.0
      %1398 = vmatpush.msra.mxu0 0.0
      %1399 = vmatpush.msra.mxu0 0.0
      %1400 = vmatpush.msra.mxu0 0.0
      %1401 = vmatpush.msra.mxu0 0.0
      %1402 = vmatpush.msra.mxu0 %v1360
      %1403 = vmatpush.msra.mxu0 %v1359
      %1404 = vmatpush.msra.mxu0 %v1358
      %1405 = vmatpush.msra.mxu0 %v1357
      %1406 = vmatpush.msra.mxu0 %v1356
      %1407 = vmatpush.msra.mxu0 %v1355
      %1408 = vmatpush.msra.mxu0 %v1354
      %1409 = vmatpush.msra.mxu0 %v1353
      %1410 = vmatmul.f32.gmra.mxu0 %v1362
      %v1411 = vpop.f32.mrf.mxu0
      %v1412 = vadd.f32 0.0, %v1411
      %1413 = vmatmul.f32.gmra.mxu0 %v1365
      %v1414 = vpop.f32.mrf.mxu0
      %v1415 = vadd.f32 0.0, %v1414
      %1416 = vmatmul.f32.gmra.mxu0 %v1368
      %v1417 = vpop.f32.mrf.mxu0
      %v1418 = vadd.f32 0.0, %v1417
      %1419 = vmatmul.f32.gmra.mxu0 %v1371
      %v1420 = vpop.f32.mrf.mxu0
      %v1421 = vadd.f32 0.0, %v1420
      %1422 = vmatmul.f32.gmra.mxu0 %v1374
      %v1423 = vpop.f32.mrf.mxu0
      %v1424 = vadd.f32 0.0, %v1423
      %1425 = vmatmul.f32.gmra.mxu0 %v1377
      %v1426 = vpop.f32.mrf.mxu0
      %v1427 = vadd.f32 0.0, %v1426
      %1428 = vmatmul.f32.gmra.mxu0 %v1380
      %v1429 = vpop.f32.mrf.mxu0
      %v1430 = vadd.f32 0.0, %v1429
      %1431 = vmatmul.f32.gmra.mxu0 %v1383
      %v1432 = vpop.f32.mrf.mxu0
      %v1433 = vadd.f32 0.0, %v1432
      %1434 = vmatmul.f32.gmra.mxu0 %v1386
      %v1435 = vpop.f32.mrf.mxu0
      %v1436 = vadd.f32 0.0, %v1435
      %1437 = vmatmul.f32.gmra.mxu0 %v1389
      %v1438 = vpop.f32.mrf.mxu0
      %v1439 = vadd.f32 0.0, %v1438
      %1440 = vmatmul.f32.gmra.mxu0 %v1392
      %v1441 = vpop.f32.mrf.mxu0
      %v1442 = vadd.f32 0.0, %v1441
      %1443 = vdwg.mxu0
      %v1444 = vadd.f32 %v1286, %v1412
      %v1445 = vadd.f32 %v1287, %v1415
      %v1446 = vadd.f32 %v1288, %v1418
      %v1447 = vadd.f32 %v1289, %v1421
      %v1448 = vadd.f32 %v1290, %v1424
      %v1449 = vadd.f32 %v1291, %v1427
      %v1450 = vadd.f32 %v1292, %v1430
      %v1451 = vadd.f32 %v1293, %v1433
      %v1452 = vadd.f32 %v1294, %v1436
      %v1453 = vadd.f32 %v1295, %v1439
      %v1454 = vadd.f32 %v1296, %v1442
      %1455 = vst [vmem:[%s253] sm:$0xff] %v1444
      %1456 = vst [vmem:[%s253 + $0x8] sm:$0xff] %v1445
      %1457 = vst [vmem:[%s253 + $0x10] sm:$0xff] %v1446
      %1458 = vst [vmem:[%s253 + $0x18] sm:$0xff] %v1447
      %1459 = vst [vmem:[%s253 + $0x20] sm:$0xff] %v1448
      %1460 = vst [vmem:[%s253 + $0x28] sm:$0xff] %v1449
      %1461 = vst [vmem:[%s253 + $0x30] sm:$0xff] %v1450
      %1462 = vst [vmem:[%s253 + $0x38] sm:$0xff] %v1451
      %1463 = vst [vmem:[%s253 + $0x40] sm:$0xff] %v1452
      %1464 = vst [vmem:[%s253 + $0x48] sm:$0xff] %v1453
      %1465 = vst [vmem:[%s253 + $0x50] sm:$0xff] %v1454
      %s1466 = smul.u32 11, %s17
      %p1467 = scmp.lt.s32.totalorder %s1466, 21
      %s1468 = scalar_select %p1467, %s1466, 21
      %s1469 = smul.addr %s1468, 8
      %s1470 = scalar_lea.vmem %s6, %s1469
      // Predicated region
      $region45: #{ssd_forward.1} parent=43 // pred_check
        %p1471 = pneg %p166
      $region46: #{ssd_forward.1} parent=43 // pred_check_branch
        %1473 = sbr.rel (%p1471) target = $region48
      $region47: #{ssd_forward.1} parent=43 // pred_region
        %s1474 = smul.u32 11, %s17
      $region48: #{ssd_forward.1} parent=43 // pred_fallthru
        _
    $region44: #{ssd_forward.1} parent=5 // pred_fallthru
      _
    %p1475 = scmp.le.s32.totalorder 2, %s12
    // Predicated region
    $region49: #{ssd_forward.1} parent=5 // pred_check
      %p1476 = pneg %p1475
    $region50: #{ssd_forward.1} parent=5 // pred_check_branch
      %1478 = sbr.rel (%p1476) target = $region52
    $region51: #{ssd_forward.1} parent=5 // pred_region
      %s1479 = ssub.s32 %s12, 2
      // Predicated region
      $region53: #{ssd_forward.1} parent=51 // pred_check
        %p1480 = pneg %p172
      $region54: #{ssd_forward.1} parent=51 // pred_check_branch
        %1482 = sbr.rel (%p1480) target = $region56
      $region55: #{ssd_forward.1} parent=51 // pred_region
        %s1483 = smul.u32 11, %s18
        %p1484 = scmp.lt.s32.totalorder %s1483, 21
        %s1485 = scalar_select %p1484, %s1483, 21
        %s1486 = smul.addr %s1485, 8
        %s1487 = scalar_lea.vmem %s6, %s1486
      $region56: #{ssd_forward.1} parent=51 // pred_fallthru
        _
    $region52: #{ssd_forward.1} parent=5 // pred_fallthru
      _
  $region6: #{ssd_forward.1} parent=0 // loop_footer
    %s16 = sadd.s32 1, %s12
  $region7: #{ssd_forward.1} parent=0 // loop_footer_branch
    %11 = sbr.rel target = $region3
  $region8: #{ssd_forward.1} parent=0 // loop_exit
    _

</llo_original>
